<compile_context>
chip_gen: v5e
topology: v5e:2x2
jax: 0.10.0
libtpu: 0.0.40
codegen_flags: <defaults>
</compile_context>

<pallas_src>
import functools
import math

import jax
import jax.numpy as jnp
from jax.experimental import pallas as pl
from jax.experimental.pallas import tpu as pltpu


# --------------------------------------------------------------------------------------
# Kernel
# --------------------------------------------------------------------------------------
def _pos_embed_kernel(x_ref, emat_ref, div_ref, off_ref, out_ref, *, pf):
    # x_ref:   (TILE_R, PF)    f32 positions (PF positions folded per lane-row)
    # emat_ref:(PF, LANE)      0/1 expansion matrix (unused when pf == 1)
    # div_ref: (1, LANE)       per-lane frequency, repeat-interleaved & tiled
    # off_ref: (1, LANE)       per-lane phase offset: 0 (sin lanes) / pi/2 (cos lanes)
    # out_ref: (TILE_R, LANE)  lane-dense output tile
    xb = x_ref[...]
    rows = xb.shape[0]
    lane = out_ref.shape[1]

    if pf == 1:
        # D % 128 == 0: each position just splats across its D lanes (cheap VPU broadcast).
        xe = jnp.broadcast_to(xb, (rows, lane))
    else:
        # Fold PF positions into the lane axis: xe[r, p*D + d] = xb[r, p].
        # 0/1 matrix on the idle MXU at HIGHEST precision -> exact expansion.
        xe = jnp.dot(
            xb,
            emat_ref[...],
            precision=jax.lax.Precision.HIGHEST,
            preferred_element_type=jnp.float32,
        )

    # Single transcendental: even channels sin(x*div), odd channels cos = sin(. + pi/2).
    phase = xe * div_ref[...] + off_ref[...]
    out_ref[...] = jnp.sin(phase).astype(out_ref.dtype)


# --------------------------------------------------------------------------------------
# Wrapper
# --------------------------------------------------------------------------------------
def _lane_fold(d, lane_target=512, lane_max=4096):
    """Positions-per-row PF and lane width LANE = PF*D so LANE % 128 == 0 (when cheap)."""
    pf = 128 // math.gcd(d, 128)
    if pf > 1 and pf * d > lane_max:
        # Unusual large D not divisible by 128: keep the natural layout.
        return 1, d
    lane = pf * d
    if pf > 1:
        while lane < lane_target:  # widen for wide unmasked stores
            pf *= 2
            lane *= 2
    return pf, lane


def _tile_rows(num_rows, lane, itemsize, max_tile_bytes):
    rows = max(1, max_tile_bytes // (lane * itemsize))
    if rows >= num_rows:
        return num_rows
    return max(8, (rows // 8) * 8)


def make_div_param(embed_dim: int) -> jnp.ndarray:
    """Deterministic init identical to the PyTorch __init__."""
    if embed_dim % 2 != 0:
        raise ValueError(
            f"Cannot use sin/cos positional encoding with odd dimension (got dim={embed_dim})"
        )
    return jnp.exp(
        jnp.arange(0.0, embed_dim, 2.0, dtype=jnp.float32) * -(math.log(10000.0) / embed_dim)
    )


def sinusoidal_1d_pos_embed(
    x: jnp.ndarray,
    div: jnp.ndarray,
    *,
    out_dtype=jnp.float32,          # pass jnp.bfloat16 to halve HBM write traffic if OK downstream
    max_tile_bytes: int = 2 << 20,  # ~2 MiB output tile per grid step (fits all generations)
) -> jnp.ndarray:
    """x: (B, L) float positions; div: (D//2,) frequencies. Returns (B, L, D)."""
    B, L = x.shape
    D = 2 * div.shape[0]
    N = B * L
    itemsize = jnp.dtype(out_dtype).itemsize

    PF, LANE = _lane_fold(D)
    R = pl.cdiv(N, PF)                         # lane-rows of positions
    tile_r = _tile_rows(R, LANE, itemsize, max_tile_bytes)
    R_pad = pl.cdiv(R, tile_r) * tile_r
    N_pad = R_pad * PF
    grid = (R_pad // tile_r,)

    # Per-lane frequency (repeat-interleave by 2) and phase offset (0 -> sin, pi/2 -> cos),
    # tiled PF times along the folded lane axis.  Tiny, constant, resident in VMEM.
    div_d = jnp.repeat(div.astype(jnp.float32), 2)                              # (D,)
    off_d = jnp.tile(jnp.array([0.0, math.pi / 2.0], jnp.float32), D // 2)      # (D,)
    div_row = jnp.tile(div_d, PF).reshape(1, LANE)
    off_row = jnp.tile(off_d, PF).reshape(1, LANE)
    # 0/1 expansion matrix: emat[p, p*D + d] = 1   (unused when PF == 1).
    emat = jnp.repeat(jnp.eye(PF, dtype=jnp.float32), D, axis=1)                # (PF, LANE)

    # Positions: flatten (no ×D pre-expansion — that would add ~output-sized HBM reads).
    x_flat = x.reshape(N).astype(jnp.float32)
    if N_pad != N:
        x_flat = jnp.pad(x_flat, (0, N_pad - N))
    x2d = x_flat.reshape(R_pad, PF)

    cost = pl.CostEstimate(
        flops=int(2 * R_pad * LANE * (PF + 1)),
        transcendentals=int(R_pad * LANE),
        bytes_accessed=int(x2d.size * 4 + R_pad * LANE * itemsize + emat.size * 4),
    )

    out2d = pl.pallas_call(
        functools.partial(_pos_embed_kernel, pf=PF),
        out_shape=jax.ShapeDtypeStruct((R_pad, LANE), out_dtype),
        grid=grid,
        in_specs=[
            pl.BlockSpec((tile_r, PF), lambda i: (i, 0)),   # position tile (tiny)
            pl.BlockSpec((PF, LANE), lambda i: (0, 0)),     # expansion matrix (resident)
            pl.BlockSpec((1, LANE), lambda i: (0, 0)),      # frequencies   (resident)
            pl.BlockSpec((1, LANE), lambda i: (0, 0)),      # phase offsets (resident)
        ],
        out_specs=pl.BlockSpec((tile_r, LANE), lambda i: (i, 0)),
        compiler_params=pltpu.CompilerParams(
            dimension_semantics=("parallel",),              # v7x: split rows across both TCs
        ),
        cost_estimate=cost,
    )(x2d, emat, div_row, off_row)

    out = out2d.reshape(N_pad, D)   # contiguous "un-fold" — pure metadata reshape
    if N_pad != N:
        out = out[:N]
    return out.reshape(B, L, D)


# --------------------------------------------------------------------------------------
# Reference (mirrors the PyTorch forward)
# --------------------------------------------------------------------------------------
def _reference(x, div):
    B, L = x.shape
    D = 2 * div.shape[0]
    phase = x[..., None].astype(jnp.float32) * div.astype(jnp.float32)[None, None, :]
    out = jnp.zeros((B, L, D), jnp.float32)
    out = out.at[:, :, 0:D:2].set(jnp.sin(phase))
    out = out.at[:, :, 1:D:2].set(jnp.cos(phase))
    return out


if __name__ == "__main__":
    key = jax.random.PRNGKey(0)
    k1, k2 = jax.random.split(key)

    # Config 1: embed_dim=32 (not a multiple of 128) -> lane-folded / MXU-expansion path,
    # with N not a multiple of the fold (exercises padding + slice) and a forced multi-step grid.
    length, embed_dim = 64, 32
    B, L = 2, 250
    div = make_div_param(embed_dim)
    x = jax.random.uniform(k1, (B, L), dtype=jnp.float32, minval=0.0, maxval=float(length))
    out = jax.block_until_ready(sinusoidal_1d_pos_embed(x, div, max_tile_bytes=16 * 1024))
    ref = _reference(x, div)
    assert out.shape == (B, L, embed_dim)
    assert jnp.allclose(out, ref, atol=2e-5, rtol=2e-5), "mismatch vs reference (folded path)"

    # Config 2: embed_dim=128 (multiple of 128) -> naturally lane-dense broadcast path.
    length, embed_dim = 64, 128
    B, L = 2, 64
    div = make_div_param(embed_dim)
    x = jax.random.uniform(k2, (B, L), dtype=jnp.float32, minval=0.0, maxval=float(length))
    out = jax.block_until_ready(sinusoidal_1d_pos_embed(x, div, max_tile_bytes=16 * 1024))
    ref = _reference(x, div)
    assert out.shape == (B, L, embed_dim)
    assert jnp.allclose(out, ref, atol=2e-5, rtol=2e-5), "mismatch vs reference (broadcast path)"

    print("KERNEL_OK")
</pallas_src>

<mosaic_0001>
module attributes {stable_mosaic.version = 11 : i64} {
  func.func @_pos_embed_kernel(%arg0: i32, %arg1: memref<8x16xf32, #tpu.memory_space<vmem>>, %arg2: memref<16x512xf32, #tpu.memory_space<vmem>>, %arg3: memref<1x512xf32, #tpu.memory_space<vmem>>, %arg4: memref<1x512xf32, #tpu.memory_space<vmem>>, %arg5: memref<8x512xf32, #tpu.memory_space<vmem>>) attributes {dimension_semantics = [#tpu.dimension_semantics<parallel>], iteration_bounds = array<i64: 4>, scalar_prefetch = 0 : i64, scratch_operands = 0 : i64, tpu.core_type = #tpu.core_type<tc>, window_params = [{transform_indices = @transform_0, window_bounds = array<i64: 8, 16>}, {pipeline_mode = #tpu.pipeline_mode<synchronous>, transform_indices = @transform_1, window_bounds = array<i64: 16, 512>}, {pipeline_mode = #tpu.pipeline_mode<synchronous>, transform_indices = @transform_2, window_bounds = array<i64: 1, 512>}, {pipeline_mode = #tpu.pipeline_mode<synchronous>, transform_indices = @transform_3, window_bounds = array<i64: 1, 512>}, {transform_indices = @transform_4, window_bounds = array<i64: 8, 512>}]} {
    %c0 = arith.constant 0 : index
    %c0_0 = arith.constant 0 : index
    %0 = vector.load %arg1[%c0, %c0_0] : memref<8x16xf32, #tpu.memory_space<vmem>>, vector<8x16xf32>
    %c0_1 = arith.constant 0 : index
    %c0_2 = arith.constant 0 : index
    %1 = vector.load %arg2[%c0_1, %c0_2] : memref<16x512xf32, #tpu.memory_space<vmem>>, vector<16x512xf32>
    %cst = arith.constant dense<0.000000e+00> : vector<8x512xf32>
    %2 = tpu.matmul %0, %1, %cst {dimension_numbers = #tpu.dot_dimension_numbers<[1], [0], [0], [1], [0, 0, 1, 1], [], []>, precision = #tpu.contract_precision<fp32>} : vector<8x16xf32>, vector<16x512xf32>, vector<8x512xf32> -> vector<8x512xf32>
    %c0_3 = arith.constant 0 : index
    %c0_4 = arith.constant 0 : index
    %3 = vector.load %arg3[%c0_3, %c0_4] : memref<1x512xf32, #tpu.memory_space<vmem>>, vector<1x512xf32>
    %4 = vector.broadcast %3 : vector<1x512xf32> to vector<8x512xf32>
    %5 = arith.mulf %2, %4 : vector<8x512xf32>
    %c0_5 = arith.constant 0 : index
    %c0_6 = arith.constant 0 : index
    %6 = vector.load %arg4[%c0_5, %c0_6] : memref<1x512xf32, #tpu.memory_space<vmem>>, vector<1x512xf32>
    %7 = vector.broadcast %6 : vector<1x512xf32> to vector<8x512xf32>
    %8 = arith.addf %5, %7 : vector<8x512xf32>
    %9 = math.sin %8 : vector<8x512xf32>
    %c0_7 = arith.constant 0 : index
    %c0_8 = arith.constant 0 : index
    %10 = vector.load %arg5[%c0_7, %c0_8] : memref<8x512xf32, #tpu.memory_space<vmem>>, vector<8x512xf32>
    tpu.vector_store %arg5[%c0_7, %c0_8], %9 {strides = array<i32>} : memref<8x512xf32, #tpu.memory_space<vmem>>, vector<8x512xf32>,
    return
  }
  func.func @transform_0(%arg0: i32) -> (i32, i32) {
    %c0_i32 = arith.constant 0 : i32
    %c0_i32_0 = arith.constant 0 : i32
    return %arg0, %c0_i32 : i32, i32
  }
  func.func @transform_1(%arg0: i32) -> (i32, i32) {
    %c0_i32 = arith.constant 0 : i32
    %c0_i32_0 = arith.constant 0 : i32
    %c0_i32_1 = arith.constant 0 : i32
    return %c0_i32, %c0_i32_0 : i32, i32
  }
  func.func @transform_2(%arg0: i32) -> (i32, i32) {
    %c0_i32 = arith.constant 0 : i32
    %c0_i32_0 = arith.constant 0 : i32
    %c0_i32_1 = arith.constant 0 : i32
    return %c0_i32, %c0_i32_0 : i32, i32
  }
  func.func @transform_3(%arg0: i32) -> (i32, i32) {
    %c0_i32 = arith.constant 0 : i32
    %c0_i32_0 = arith.constant 0 : i32
    %c0_i32_1 = arith.constant 0 : i32
    return %c0_i32, %c0_i32_0 : i32, i32
  }
  func.func @transform_4(%arg0: i32) -> (i32, i32) {
    %c0_i32 = arith.constant 0 : i32
    %c0_i32_0 = arith.constant 0 : i32
    return %arg0, %c0_i32 : i32, i32
  }
}

</mosaic_0001>

<llo_original>
// kernel: tpu_custom_call.1
$region0: #{tpu_custom_call.1}
  #allocation0 [shape = 'u32[]', space=smem, size = 0x4, offset = 0x4, fixed_abs, tag = 'smem constant byte address 0x4 - core index']
  #allocation1 [shape = 'u32[72,128]{1,0:T(1,128)}', space=vmem, size = 0x9000, scoped, tag = 'internal scratch']
  %s0 = inlined_call_operand.vmem [shape: f32[32,16], index: 0, kind: input, shape index: {}]
  %s1 = inlined_call_operand.hbm [shape: f32[16,512], index: 1, kind: input, shape index: {}]
  %s2 = inlined_call_operand.vmem [shape: f32[1,512], index: 2, kind: input, shape index: {}]
  %s3 = inlined_call_operand.vmem [shape: f32[1,512], index: 3, kind: input, shape index: {}]
  %s4 = inlined_call_operand.hbm [shape: f32[32,512], index: 4, kind: output, shape index: {}]
  %s5 = sld [smem:[#allocation0]]
  $region53: #{tpu_custom_call.1} parent=0
    _
  %s7 = ssub.s32 1, %s5
  %s8 = scalar_select 0, %s7, %s5
  $region1: #{tpu_custom_call.1} parent=0
    #allocation2 [shape = 'u8[32768]{0}', space=vmem, size = 0x8000, scoped, tag = 'input window, operand 1, single buffered']
    #allocation3 [shape = 's32[2]{0}', space=sflag, size = 0x8, scoped, tag = 'scoped memory for tpu_custom_call.1']
    #allocation4 [shape = 's32[2]{0}', space=sflag, size = 0x8, scoped, tag = 'scoped memory for tpu_custom_call.1']
    #allocation5 [shape = 'u8[32768]{0}', space=vmem, size = 0x8000, scoped, tag = 'output window, operand 0']
    %9 = vsyncpa [#allocation3], 0
    %10 = vsyncpa [#allocation4], 0
    %s11 = scalar_lea.sflag [#allocation4], 1
    %12 = vsyncpa %s11, 0
    loop: start=0, step=1, limit=6
    $region2: #{tpu_custom_call.1} parent=1 // loop_pre_header
      _
    $region3: #{tpu_custom_call.1} parent=1 // loop_header
      %s14 = sphi 0, %s18
      %p15 = scmp.ge.s32.totalorder %s14, 6
      %s24 = sphi 0, %s26
      %s27 = sphi 0, %s24
      %s28 = sphi 0, %s27
      %s44 = sphi 0, %s28
      %s48 = sphi 0, %s48
      %s50 = sphi 0, %s48
      %s51 = sphi 0, %s50
      %s65 = sphi 0, %s51
      %s69 = sphi 0, %s69
      %s71 = sphi 0, %s69
      %s72 = sphi 0, %s71
      %s86 = sphi 0, %s72
      %s90 = sphi 0, %s90
      %s92 = sphi 0, %s90
      %s93 = sphi 0, %s92
      %s107 = sphi 0, %s93
      %s113 = sphi 0, %s115
      %s116 = sphi 0, %s113
      %s117 = sphi 0, %s116
      %s133 = sphi 0, %s117
    $region4: #{tpu_custom_call.1} parent=1 // loop_header_branch
      %17 = sbr.rel (%p15) target = $region8
    $region5: #{tpu_custom_call.1} parent=1 // loop_body
      %s19 = ssub.s32 %s14, 1
      %s20 = ssub.s32 %s14, 2
      %s21 = sadd.s32 %s14, 1
      %s22 = ssub.s32 %s14, %s21
      %p23 = scmp.eq.s32.totalorder %s22, 0
      %s25 = sadd.s32 %s24, 1
      %s26 = scalar_select %p23, %s24, %s25
      %p29 = pneg %p23
      %p30 = scmp.eq.s32.totalorder %s14, 3
      %p31 = por %p29, %p30
      %p32 = scmp.ne.s32.totalorder %s24, %s27
      %p33 = scmp.eq.s32.totalorder %s14, 0
      %p34 = por %p32, %p33
      %p35 = scmp.ne.s32.totalorder %s24, %s27
      %p36 = scmp.eq.s32.totalorder %s19, 3
      %p37 = por %p35, %p36
      %p38 = scmp.ne.s32.totalorder %s27, %s28
      %p39 = scmp.eq.s32.totalorder %s19, 0
      %p40 = por %p38, %p39
      %p41 = scmp.ne.s32.totalorder %s27, %s28
      %p42 = scmp.eq.s32.totalorder %s20, 3
      %p43 = por %p41, %p42
      %p45 = scmp.ne.s32.totalorder %s28, %s44
      %p46 = scmp.eq.s32.totalorder %s20, 0
      %p47 = por %p45, %p46
      %s49 = sadd.s32 %s48, 1
      %p52 = scmp.eq.s32.totalorder %s14, 3
      %p53 = scmp.ne.s32.totalorder %s48, %s50
      %p54 = scmp.eq.s32.totalorder %s14, 0
      %p55 = por %p53, %p54
      %p56 = scmp.ne.s32.totalorder %s48, %s50
      %p57 = scmp.eq.s32.totalorder %s19, 3
      %p58 = por %p56, %p57
      %p59 = scmp.ne.s32.totalorder %s50, %s51
      %p60 = scmp.eq.s32.totalorder %s19, 0
      %p61 = por %p59, %p60
      %p62 = scmp.ne.s32.totalorder %s50, %s51
      %p63 = scmp.eq.s32.totalorder %s20, 3
      %p64 = por %p62, %p63
      %p66 = scmp.ne.s32.totalorder %s51, %s65
      %p67 = scmp.eq.s32.totalorder %s20, 0
      %p68 = por %p66, %p67
      %s70 = sadd.s32 %s69, 1
      %p73 = scmp.eq.s32.totalorder %s14, 3
      %p74 = scmp.ne.s32.totalorder %s69, %s71
      %p75 = scmp.eq.s32.totalorder %s14, 0
      %p76 = por %p74, %p75
      %p77 = scmp.ne.s32.totalorder %s69, %s71
      %p78 = scmp.eq.s32.totalorder %s19, 3
      %p79 = por %p77, %p78
      %p80 = scmp.ne.s32.totalorder %s71, %s72
      %p81 = scmp.eq.s32.totalorder %s19, 0
      %p82 = por %p80, %p81
      %p83 = scmp.ne.s32.totalorder %s71, %s72
      %p84 = scmp.eq.s32.totalorder %s20, 3
      %p85 = por %p83, %p84
      %p87 = scmp.ne.s32.totalorder %s72, %s86
      %p88 = scmp.eq.s32.totalorder %s20, 0
      %p89 = por %p87, %p88
      %s91 = sadd.s32 %s90, 1
      %p94 = scmp.eq.s32.totalorder %s14, 3
      %p95 = scmp.ne.s32.totalorder %s90, %s92
      %p96 = scmp.eq.s32.totalorder %s14, 0
      %p97 = por %p95, %p96
      %p98 = scmp.ne.s32.totalorder %s90, %s92
      %p99 = scmp.eq.s32.totalorder %s19, 3
      %p100 = por %p98, %p99
      %p101 = scmp.ne.s32.totalorder %s92, %s93
      %p102 = scmp.eq.s32.totalorder %s19, 0
      %p103 = por %p101, %p102
      %p104 = scmp.ne.s32.totalorder %s92, %s93
      %p105 = scmp.eq.s32.totalorder %s20, 3
      %p106 = por %p104, %p105
      %p108 = scmp.ne.s32.totalorder %s93, %s107
      %p109 = scmp.eq.s32.totalorder %s20, 0
      %p110 = por %p108, %p109
      %s111 = ssub.s32 %s14, %s21
      %p112 = scmp.eq.s32.totalorder %s111, 0
      %s114 = sadd.s32 %s113, 1
      %s115 = scalar_select %p112, %s113, %s114
      %p118 = pneg %p112
      %p119 = scmp.eq.s32.totalorder %s14, 3
      %p120 = por %p118, %p119
      %p121 = scmp.ne.s32.totalorder %s113, %s116
      %p122 = scmp.eq.s32.totalorder %s14, 0
      %p123 = por %p121, %p122
      %p124 = scmp.ne.s32.totalorder %s113, %s116
      %p125 = scmp.eq.s32.totalorder %s19, 3
      %p126 = por %p124, %p125
      %p127 = scmp.ne.s32.totalorder %s116, %s117
      %p128 = scmp.eq.s32.totalorder %s19, 0
      %p129 = por %p127, %p128
      %p130 = scmp.ne.s32.totalorder %s116, %s117
      %p131 = scmp.eq.s32.totalorder %s20, 3
      %p132 = por %p130, %p131
      %p134 = scmp.ne.s32.totalorder %s117, %s133
      %p135 = scmp.eq.s32.totalorder %s20, 0
      %p136 = por %p134, %p135
      %p137 = scmp.le.s32.totalorder 1, %s14
      %p138 = scmp.lt.s32.totalorder %s14, 5
      %p139 = pnand %p137, %p138
      %p140 = pneg %p139
      // Predicated region
      $region9: #{tpu_custom_call.1} parent=5 // pred_check
        _
      $region10: #{tpu_custom_call.1} parent=5 // pred_check_branch
        %142 = sbr.rel (%p139) target = $region12
      $region11: #{tpu_custom_call.1} parent=5 // pred_region
        %s143 = ssub.s32 %s14, 1
        // Predicated region
        $region13: #{tpu_custom_call.1} parent=11 // pred_check
          %p144 = pneg %p61
        $region14: #{tpu_custom_call.1} parent=11 // pred_check_branch
          %146 = sbr.rel (%p144) target = $region16
        $region15: #{tpu_custom_call.1} parent=11 // pred_region
          %148 = vsyncadd [#allocation3], 0
          %s149 = sshll.u32 %s1, 4
          %s150 = int_to_ptr.hbm [resolvable:$true] %s149
          %s151 = sshll.u32 [#allocation2], 4
          %s152 = int_to_ptr.vmem [resolvable:$true] %s151
          %157 = dma.hbm_to_vmem [thread:$0]  %s150, 1024, %s152, [#allocation3], 512, 512, 32
        $region16: #{tpu_custom_call.1} parent=11 // pred_fallthru
          _
        // Predicated region
        $region17: #{tpu_custom_call.1} parent=11 // pred_check
          %p158 = pneg %p82
        $region18: #{tpu_custom_call.1} parent=11 // pred_check_branch
          %160 = sbr.rel (%p158) target = $region20
        $region19: #{tpu_custom_call.1} parent=11 // pred_region
          _
        $region20: #{tpu_custom_call.1} parent=11 // pred_fallthru
          _
        // Predicated region
        $region21: #{tpu_custom_call.1} parent=11 // pred_check
          %p161 = pneg %p103
        $region22: #{tpu_custom_call.1} parent=11 // pred_check_branch
          %163 = sbr.rel (%p161) target = $region24
        $region23: #{tpu_custom_call.1} parent=11 // pred_region
          _
        $region24: #{tpu_custom_call.1} parent=11 // pred_fallthru
          _
      $region12: #{tpu_custom_call.1} parent=5 // pred_fallthru
        _
      %p164 = scmp.lt.s32.totalorder %s14, 4
      // Predicated region
      $region25: #{tpu_custom_call.1} parent=5 // pred_check
        %p165 = pneg %p164
      $region26: #{tpu_custom_call.1} parent=5 // pred_check_branch
        %167 = sbr.rel (%p165) target = $region28
      $region27: #{tpu_custom_call.1} parent=5 // pred_region
        // Predicated region
        $region29: #{tpu_custom_call.1} parent=27 // pred_check
          %p168 = pneg %p34
        $region30: #{tpu_custom_call.1} parent=27 // pred_check_branch
          %170 = sbr.rel (%p168) target = $region32
        $region31: #{tpu_custom_call.1} parent=27 // pred_region
          %p171 = scmp.lt.s32.totalorder %s14, 3
          %s172 = scalar_select %p171, %s14, 3
          %s173 = smul.addr %s172, 8
          %s174 = scalar_lea.vmem %s0, %s173
        $region32: #{tpu_custom_call.1} parent=27 // pred_fallthru
          _
      $region28: #{tpu_custom_call.1} parent=5 // pred_fallthru
        _
      %p175 = scmp.le.s32.totalorder 1, %s14
      %p176 = scmp.lt.s32.totalorder %s14, 5
      %p177 = pnand %p175, %p176
      %p178 = pneg %p177
      // Predicated region
      $region33: #{tpu_custom_call.1} parent=5 // pred_check
        _
      $region34: #{tpu_custom_call.1} parent=5 // pred_check_branch
        %180 = sbr.rel (%p177) target = $region36
      $region35: #{tpu_custom_call.1} parent=5 // pred_region
        %s181 = ssub.s32 %s14, 1
        // Predicated region
        $region37: #{tpu_custom_call.1} parent=35 // pred_check
          %p182 = pneg %p61
        $region38: #{tpu_custom_call.1} parent=35 // pred_check_branch
          %184 = sbr.rel (%p182) target = $region40
        $region39: #{tpu_custom_call.1} parent=35 // pred_region
          %186 = dma.done [#allocation3], 1024
        $region40: #{tpu_custom_call.1} parent=35 // pred_fallthru
          _
        %p187 = scmp.lt.s32.totalorder %s19, 3
        %s188 = scalar_select %p187, %s19, 3
        %s189 = smul.addr %s188, 8
        %s190 = scalar_lea.vmem %s0, %s189
        %p191 = pneg %p40
        %p192 = pneg %p37
        %p193 = pneg %p61
        %p194 = pneg %p58
        %p195 = pneg %p82
        %p196 = pneg %p79
        %p197 = pneg %p103
        %p198 = pneg %p100
        %p199 = pneg %p129
        %p200 = pneg %p126
        %s201 = sand.u32 %s116, 1
        %s202 = scalar_lea.sflag [#allocation4], %s201
        %s203 = sand.u32 %s116, 1
        %s204 = smul.addr %s203, 32
        %s205 = scalar_lea.vmem [#allocation5], %s204
        %p206 = scmp.lt.s32.totalorder %s19, 3
        %s207 = scalar_select %p206, %s19, 3
        %s208 = smul.addr %s207, 8
        %s209 = scalar_lea.vmem %s0, %s208
        %v210 = vld [vmem:[%s209] sm:$0xff]
        %v211 = vld [vmem:[#allocation2] sm:$0xff]
        %v212 = vld [vmem:[#allocation2 + $0x8] sm:$0xff]
        %v213 = vld [vmem:[#allocation2 + $0x10] sm:$0xff]
        %v214 = vld [vmem:[#allocation2 + $0x18] sm:$0xff]
        %v215 = vld [vmem:[#allocation2 + $0x20] sm:$0xff]
        %v216 = vld [vmem:[#allocation2 + $0x28] sm:$0xff]
        %v217 = vld [vmem:[#allocation2 + $0x30] sm:$0xff]
        %v218 = vld [vmem:[#allocation2 + $0x38] sm:$0xff]
        %vm219 = vcmask 130048
        %v221 = vsel %vm219, %v210, 0
        %223 = vmatpush.msra.mxu0 0.0
        %224 = vmatpush.msra.mxu0 0.0
        %225 = vmatpush.msra.mxu0 0.0
        %226 = vmatpush.msra.mxu0 0.0
        %227 = vmatpush.msra.mxu0 0.0
        %228 = vmatpush.msra.mxu0 0.0
        %229 = vmatpush.msra.mxu0 0.0
        %230 = vmatpush.msra.mxu0 0.0
        %231 = vmatpush.msra.mxu0 0.0
        %232 = vmatpush.msra.mxu0 0.0
        %233 = vmatpush.msra.mxu0 0.0
        %234 = vmatpush.msra.mxu0 0.0
        %235 = vmatpush.msra.mxu0 0.0
        %236 = vmatpush.msra.mxu0 0.0
        %v237 = vand.u32 %v215, 4294901760
        %238 = vmatpush.msra.mxu0 %v237
        %v239 = vand.u32 %v211, 4294901760
        %240 = vmatpush.msra.mxu0 %v239
        %v241 = vand.u32 %v221, 4294901760
        %v242 = vsub.f32 %v221, %v241
        %v243 = vand.u32 %v242, 4294901760
        %v244 = vsub.f32 %v242, %v243
        %v245 = vand.u32 %v244, 4294901760
        %246 = vmatmul.f32.gmra.mxu0 %v245
        %v247 = vpop.f32.mrf.mxu0
        %v248 = vadd.f32 0.0, %v247
        %249 = vdwg.mxu0
        %250 = vmatpush.msra.mxu0 0.0
        %251 = vmatpush.msra.mxu0 0.0
        %252 = vmatpush.msra.mxu0 0.0
        %253 = vmatpush.msra.mxu0 0.0
        %254 = vmatpush.msra.mxu0 0.0
        %255 = vmatpush.msra.mxu0 0.0
        %256 = vmatpush.msra.mxu0 0.0
        %257 = vmatpush.msra.mxu0 0.0
        %258 = vmatpush.msra.mxu0 0.0
        %259 = vmatpush.msra.mxu0 0.0
        %260 = vmatpush.msra.mxu0 0.0
        %261 = vmatpush.msra.mxu0 0.0
        %262 = vmatpush.msra.mxu0 0.0
        %263 = vmatpush.msra.mxu0 0.0
        %v264 = vand.u32 %v215, 4294901760
        %v265 = vsub.f32 %v215, %v264
        %v266 = vand.u32 %v265, 4294901760
        %v267 = vsub.f32 %v265, %v266
        %v268 = vand.u32 %v267, 4294901760
        %269 = vmatpush.msra.mxu0 %v268
        %v270 = vand.u32 %v211, 4294901760
        %v271 = vsub.f32 %v211, %v270
        %v272 = vand.u32 %v271, 4294901760
        %v273 = vsub.f32 %v271, %v272
        %v274 = vand.u32 %v273, 4294901760
        %275 = vmatpush.msra.mxu0 %v274
        %v276 = vand.u32 %v221, 4294901760
        %277 = vmatmul.f32.gmra.mxu0 %v276
        %v278 = vpop.f32.mrf.mxu0
        %v279 = vadd.f32 %v248, %v278
        %280 = vdwg.mxu0
        %281 = vmatpush.msra.mxu0 0.0
        %282 = vmatpush.msra.mxu0 0.0
        %283 = vmatpush.msra.mxu0 0.0
        %284 = vmatpush.msra.mxu0 0.0
        %285 = vmatpush.msra.mxu0 0.0
        %286 = vmatpush.msra.mxu0 0.0
        %287 = vmatpush.msra.mxu0 0.0
        %288 = vmatpush.msra.mxu0 0.0
        %289 = vmatpush.msra.mxu0 0.0
        %290 = vmatpush.msra.mxu0 0.0
        %291 = vmatpush.msra.mxu0 0.0
        %292 = vmatpush.msra.mxu0 0.0
        %293 = vmatpush.msra.mxu0 0.0
        %294 = vmatpush.msra.mxu0 0.0
        %v295 = vand.u32 %v215, 4294901760
        %v296 = vsub.f32 %v215, %v295
        %297 = vmatpush.msra.mxu0 %v296
        %v298 = vand.u32 %v211, 4294901760
        %v299 = vsub.f32 %v211, %v298
        %300 = vmatpush.msra.mxu0 %v299
        %v301 = vand.u32 %v221, 4294901760
        %v302 = vsub.f32 %v221, %v301
        %303 = vmatmul.f32.gmra.mxu0 %v302
        %v304 = vpop.f32.mrf.mxu0
        %v305 = vadd.f32 %v279, %v304
        %306 = vdwg.mxu0
        %307 = vmatpush.msra.mxu0 0.0
        %308 = vmatpush.msra.mxu0 0.0
        %309 = vmatpush.msra.mxu0 0.0
        %310 = vmatpush.msra.mxu0 0.0
        %311 = vmatpush.msra.mxu0 0.0
        %312 = vmatpush.msra.mxu0 0.0
        %313 = vmatpush.msra.mxu0 0.0
        %314 = vmatpush.msra.mxu0 0.0
        %315 = vmatpush.msra.mxu0 0.0
        %316 = vmatpush.msra.mxu0 0.0
        %317 = vmatpush.msra.mxu0 0.0
        %318 = vmatpush.msra.mxu0 0.0
        %319 = vmatpush.msra.mxu0 0.0
        %320 = vmatpush.msra.mxu0 0.0
        %v321 = vand.u32 %v215, 4294901760
        %322 = vmatpush.msra.mxu0 %v321
        %v323 = vand.u32 %v211, 4294901760
        %324 = vmatpush.msra.mxu0 %v323
        %v325 = vand.u32 %v221, 4294901760
        %v326 = vsub.f32 %v221, %v325
        %v327 = vand.u32 %v326, 4294901760
        %328 = vmatmul.f32.gmra.mxu0 %v327
        %v329 = vpop.f32.mrf.mxu0
        %v330 = vadd.f32 %v305, %v329
        %331 = vdwg.mxu0
        %332 = vmatpush.msra.mxu0 0.0
        %333 = vmatpush.msra.mxu0 0.0
        %334 = vmatpush.msra.mxu0 0.0
        %335 = vmatpush.msra.mxu0 0.0
        %336 = vmatpush.msra.mxu0 0.0
        %337 = vmatpush.msra.mxu0 0.0
        %338 = vmatpush.msra.mxu0 0.0
        %339 = vmatpush.msra.mxu0 0.0
        %340 = vmatpush.msra.mxu0 0.0
        %341 = vmatpush.msra.mxu0 0.0
        %342 = vmatpush.msra.mxu0 0.0
        %343 = vmatpush.msra.mxu0 0.0
        %344 = vmatpush.msra.mxu0 0.0
        %345 = vmatpush.msra.mxu0 0.0
        %v346 = vand.u32 %v215, 4294901760
        %v347 = vsub.f32 %v215, %v346
        %v348 = vand.u32 %v347, 4294901760
        %349 = vmatpush.msra.mxu0 %v348
        %v350 = vand.u32 %v211, 4294901760
        %v351 = vsub.f32 %v211, %v350
        %v352 = vand.u32 %v351, 4294901760
        %353 = vmatpush.msra.mxu0 %v352
        %v354 = vand.u32 %v221, 4294901760
        %355 = vmatmul.f32.gmra.mxu0 %v354
        %v356 = vpop.f32.mrf.mxu0
        %v357 = vadd.f32 %v330, %v356
        %358 = vdwg.mxu0
        %359 = vmatpush.msra.mxu0 0.0
        %360 = vmatpush.msra.mxu0 0.0
        %361 = vmatpush.msra.mxu0 0.0
        %362 = vmatpush.msra.mxu0 0.0
        %363 = vmatpush.msra.mxu0 0.0
        %364 = vmatpush.msra.mxu0 0.0
        %365 = vmatpush.msra.mxu0 0.0
        %366 = vmatpush.msra.mxu0 0.0
        %367 = vmatpush.msra.mxu0 0.0
        %368 = vmatpush.msra.mxu0 0.0
        %369 = vmatpush.msra.mxu0 0.0
        %370 = vmatpush.msra.mxu0 0.0
        %371 = vmatpush.msra.mxu0 0.0
        %372 = vmatpush.msra.mxu0 0.0
        %v373 = vand.u32 %v215, 4294901760
        %374 = vmatpush.msra.mxu0 %v373
        %v375 = vand.u32 %v211, 4294901760
        %376 = vmatpush.msra.mxu0 %v375
        %v377 = vand.u32 %v221, 4294901760
        %378 = vmatmul.f32.gmra.mxu0 %v377
        %v379 = vpop.f32.mrf.mxu0
        %v380 = vadd.f32 %v357, %v379
        %381 = vdwg.mxu0
        %382 = vmatpush.msra.mxu0 0.0
        %383 = vmatpush.msra.mxu0 0.0
        %384 = vmatpush.msra.mxu0 0.0
        %385 = vmatpush.msra.mxu0 0.0
        %386 = vmatpush.msra.mxu0 0.0
        %387 = vmatpush.msra.mxu0 0.0
        %388 = vmatpush.msra.mxu0 0.0
        %389 = vmatpush.msra.mxu0 0.0
        %390 = vmatpush.msra.mxu0 0.0
        %391 = vmatpush.msra.mxu0 0.0
        %392 = vmatpush.msra.mxu0 0.0
        %393 = vmatpush.msra.mxu0 0.0
        %394 = vmatpush.msra.mxu0 0.0
        %395 = vmatpush.msra.mxu0 0.0
        %v396 = vand.u32 %v216, 4294901760
        %397 = vmatpush.msra.mxu0 %v396
        %v398 = vand.u32 %v212, 4294901760
        %399 = vmatpush.msra.mxu0 %v398
        %v400 = vand.u32 %v221, 4294901760
        %v401 = vsub.f32 %v221, %v400
        %v402 = vand.u32 %v401, 4294901760
        %v403 = vsub.f32 %v401, %v402
        %v404 = vand.u32 %v403, 4294901760
        %405 = vmatmul.f32.gmra.mxu0 %v404
        %v406 = vpop.f32.mrf.mxu0
        %v407 = vadd.f32 0.0, %v406
        %408 = vdwg.mxu0
        %409 = vmatpush.msra.mxu0 0.0
        %410 = vmatpush.msra.mxu0 0.0
        %411 = vmatpush.msra.mxu0 0.0
        %412 = vmatpush.msra.mxu0 0.0
        %413 = vmatpush.msra.mxu0 0.0
        %414 = vmatpush.msra.mxu0 0.0
        %415 = vmatpush.msra.mxu0 0.0
        %416 = vmatpush.msra.mxu0 0.0
        %417 = vmatpush.msra.mxu0 0.0
        %418 = vmatpush.msra.mxu0 0.0
        %419 = vmatpush.msra.mxu0 0.0
        %420 = vmatpush.msra.mxu0 0.0
        %421 = vmatpush.msra.mxu0 0.0
        %422 = vmatpush.msra.mxu0 0.0
        %v423 = vand.u32 %v216, 4294901760
        %v424 = vsub.f32 %v216, %v423
        %v425 = vand.u32 %v424, 4294901760
        %v426 = vsub.f32 %v424, %v425
        %v427 = vand.u32 %v426, 4294901760
        %428 = vmatpush.msra.mxu0 %v427
        %v429 = vand.u32 %v212, 4294901760
        %v430 = vsub.f32 %v212, %v429
        %v431 = vand.u32 %v430, 4294901760
        %v432 = vsub.f32 %v430, %v431
        %v433 = vand.u32 %v432, 4294901760
        %434 = vmatpush.msra.mxu0 %v433
        %v435 = vand.u32 %v221, 4294901760
        %436 = vmatmul.f32.gmra.mxu0 %v435
        %v437 = vpop.f32.mrf.mxu0
        %v438 = vadd.f32 %v407, %v437
        %439 = vdwg.mxu0
        %440 = vmatpush.msra.mxu0 0.0
        %441 = vmatpush.msra.mxu0 0.0
        %442 = vmatpush.msra.mxu0 0.0
        %443 = vmatpush.msra.mxu0 0.0
        %444 = vmatpush.msra.mxu0 0.0
        %445 = vmatpush.msra.mxu0 0.0
        %446 = vmatpush.msra.mxu0 0.0
        %447 = vmatpush.msra.mxu0 0.0
        %448 = vmatpush.msra.mxu0 0.0
        %449 = vmatpush.msra.mxu0 0.0
        %450 = vmatpush.msra.mxu0 0.0
        %451 = vmatpush.msra.mxu0 0.0
        %452 = vmatpush.msra.mxu0 0.0
        %453 = vmatpush.msra.mxu0 0.0
        %v454 = vand.u32 %v216, 4294901760
        %v455 = vsub.f32 %v216, %v454
        %456 = vmatpush.msra.mxu0 %v455
        %v457 = vand.u32 %v212, 4294901760
        %v458 = vsub.f32 %v212, %v457
        %459 = vmatpush.msra.mxu0 %v458
        %v460 = vand.u32 %v221, 4294901760
        %v461 = vsub.f32 %v221, %v460
        %462 = vmatmul.f32.gmra.mxu0 %v461
        %v463 = vpop.f32.mrf.mxu0
        %v464 = vadd.f32 %v438, %v463
        %465 = vdwg.mxu0
        %466 = vmatpush.msra.mxu0 0.0
        %467 = vmatpush.msra.mxu0 0.0
        %468 = vmatpush.msra.mxu0 0.0
        %469 = vmatpush.msra.mxu0 0.0
        %470 = vmatpush.msra.mxu0 0.0
        %471 = vmatpush.msra.mxu0 0.0
        %472 = vmatpush.msra.mxu0 0.0
        %473 = vmatpush.msra.mxu0 0.0
        %474 = vmatpush.msra.mxu0 0.0
        %475 = vmatpush.msra.mxu0 0.0
        %476 = vmatpush.msra.mxu0 0.0
        %477 = vmatpush.msra.mxu0 0.0
        %478 = vmatpush.msra.mxu0 0.0
        %479 = vmatpush.msra.mxu0 0.0
        %v480 = vand.u32 %v216, 4294901760
        %481 = vmatpush.msra.mxu0 %v480
        %v482 = vand.u32 %v212, 4294901760
        %483 = vmatpush.msra.mxu0 %v482
        %v484 = vand.u32 %v221, 4294901760
        %v485 = vsub.f32 %v221, %v484
        %v486 = vand.u32 %v485, 4294901760
        %487 = vmatmul.f32.gmra.mxu0 %v486
        %v488 = vpop.f32.mrf.mxu0
        %v489 = vadd.f32 %v464, %v488
        %490 = vdwg.mxu0
        %491 = vmatpush.msra.mxu0 0.0
        %492 = vmatpush.msra.mxu0 0.0
        %493 = vmatpush.msra.mxu0 0.0
        %494 = vmatpush.msra.mxu0 0.0
        %495 = vmatpush.msra.mxu0 0.0
        %496 = vmatpush.msra.mxu0 0.0
        %497 = vmatpush.msra.mxu0 0.0
        %498 = vmatpush.msra.mxu0 0.0
        %499 = vmatpush.msra.mxu0 0.0
        %500 = vmatpush.msra.mxu0 0.0
        %501 = vmatpush.msra.mxu0 0.0
        %502 = vmatpush.msra.mxu0 0.0
        %503 = vmatpush.msra.mxu0 0.0
        %504 = vmatpush.msra.mxu0 0.0
        %v505 = vand.u32 %v216, 4294901760
        %v506 = vsub.f32 %v216, %v505
        %v507 = vand.u32 %v506, 4294901760
        %508 = vmatpush.msra.mxu0 %v507
        %v509 = vand.u32 %v212, 4294901760
        %v510 = vsub.f32 %v212, %v509
        %v511 = vand.u32 %v510, 4294901760
        %512 = vmatpush.msra.mxu0 %v511
        %v513 = vand.u32 %v221, 4294901760
        %514 = vmatmul.f32.gmra.mxu0 %v513
        %v515 = vpop.f32.mrf.mxu0
        %v516 = vadd.f32 %v489, %v515
        %517 = vdwg.mxu0
        %518 = vmatpush.msra.mxu0 0.0
        %519 = vmatpush.msra.mxu0 0.0
        %520 = vmatpush.msra.mxu0 0.0
        %521 = vmatpush.msra.mxu0 0.0
        %522 = vmatpush.msra.mxu0 0.0
        %523 = vmatpush.msra.mxu0 0.0
        %524 = vmatpush.msra.mxu0 0.0
        %525 = vmatpush.msra.mxu0 0.0
        %526 = vmatpush.msra.mxu0 0.0
        %527 = vmatpush.msra.mxu0 0.0
        %528 = vmatpush.msra.mxu0 0.0
        %529 = vmatpush.msra.mxu0 0.0
        %530 = vmatpush.msra.mxu0 0.0
        %531 = vmatpush.msra.mxu0 0.0
        %v532 = vand.u32 %v216, 4294901760
        %533 = vmatpush.msra.mxu0 %v532
        %v534 = vand.u32 %v212, 4294901760
        %535 = vmatpush.msra.mxu0 %v534
        %v536 = vand.u32 %v221, 4294901760
        %537 = vmatmul.f32.gmra.mxu0 %v536
        %v538 = vpop.f32.mrf.mxu0
        %v539 = vadd.f32 %v516, %v538
        %540 = vdwg.mxu0
        %541 = vmatpush.msra.mxu0 0.0
        %542 = vmatpush.msra.mxu0 0.0
        %543 = vmatpush.msra.mxu0 0.0
        %544 = vmatpush.msra.mxu0 0.0
        %545 = vmatpush.msra.mxu0 0.0
        %546 = vmatpush.msra.mxu0 0.0
        %547 = vmatpush.msra.mxu0 0.0
        %548 = vmatpush.msra.mxu0 0.0
        %549 = vmatpush.msra.mxu0 0.0
        %550 = vmatpush.msra.mxu0 0.0
        %551 = vmatpush.msra.mxu0 0.0
        %552 = vmatpush.msra.mxu0 0.0
        %553 = vmatpush.msra.mxu0 0.0
        %554 = vmatpush.msra.mxu0 0.0
        %v555 = vand.u32 %v217, 4294901760
        %556 = vmatpush.msra.mxu0 %v555
        %v557 = vand.u32 %v213, 4294901760
        %558 = vmatpush.msra.mxu0 %v557
        %v559 = vand.u32 %v221, 4294901760
        %v560 = vsub.f32 %v221, %v559
        %v561 = vand.u32 %v560, 4294901760
        %v562 = vsub.f32 %v560, %v561
        %v563 = vand.u32 %v562, 4294901760
        %564 = vmatmul.f32.gmra.mxu0 %v563
        %v565 = vpop.f32.mrf.mxu0
        %v566 = vadd.f32 0.0, %v565
        %567 = vdwg.mxu0
        %568 = vmatpush.msra.mxu0 0.0
        %569 = vmatpush.msra.mxu0 0.0
        %570 = vmatpush.msra.mxu0 0.0
        %571 = vmatpush.msra.mxu0 0.0
        %572 = vmatpush.msra.mxu0 0.0
        %573 = vmatpush.msra.mxu0 0.0
        %574 = vmatpush.msra.mxu0 0.0
        %575 = vmatpush.msra.mxu0 0.0
        %576 = vmatpush.msra.mxu0 0.0
        %577 = vmatpush.msra.mxu0 0.0
        %578 = vmatpush.msra.mxu0 0.0
        %579 = vmatpush.msra.mxu0 0.0
        %580 = vmatpush.msra.mxu0 0.0
        %581 = vmatpush.msra.mxu0 0.0
        %v582 = vand.u32 %v217, 4294901760
        %v583 = vsub.f32 %v217, %v582
        %v584 = vand.u32 %v583, 4294901760
        %v585 = vsub.f32 %v583, %v584
        %v586 = vand.u32 %v585, 4294901760
        %587 = vmatpush.msra.mxu0 %v586
        %v588 = vand.u32 %v213, 4294901760
        %v589 = vsub.f32 %v213, %v588
        %v590 = vand.u32 %v589, 4294901760
        %v591 = vsub.f32 %v589, %v590
        %v592 = vand.u32 %v591, 4294901760
        %593 = vmatpush.msra.mxu0 %v592
        %v594 = vand.u32 %v221, 4294901760
        %595 = vmatmul.f32.gmra.mxu0 %v594
        %v596 = vpop.f32.mrf.mxu0
        %v597 = vadd.f32 %v566, %v596
        %598 = vdwg.mxu0
        %599 = vmatpush.msra.mxu0 0.0
        %600 = vmatpush.msra.mxu0 0.0
        %601 = vmatpush.msra.mxu0 0.0
        %602 = vmatpush.msra.mxu0 0.0
        %603 = vmatpush.msra.mxu0 0.0
        %604 = vmatpush.msra.mxu0 0.0
        %605 = vmatpush.msra.mxu0 0.0
        %606 = vmatpush.msra.mxu0 0.0
        %607 = vmatpush.msra.mxu0 0.0
        %608 = vmatpush.msra.mxu0 0.0
        %609 = vmatpush.msra.mxu0 0.0
        %610 = vmatpush.msra.mxu0 0.0
        %611 = vmatpush.msra.mxu0 0.0
        %612 = vmatpush.msra.mxu0 0.0
        %v613 = vand.u32 %v217, 4294901760
        %v614 = vsub.f32 %v217, %v613
        %615 = vmatpush.msra.mxu0 %v614
        %v616 = vand.u32 %v213, 4294901760
        %v617 = vsub.f32 %v213, %v616
        %618 = vmatpush.msra.mxu0 %v617
        %v619 = vand.u32 %v221, 4294901760
        %v620 = vsub.f32 %v221, %v619
        %621 = vmatmul.f32.gmra.mxu0 %v620
        %v622 = vpop.f32.mrf.mxu0
        %v623 = vadd.f32 %v597, %v622
        %624 = vdwg.mxu0
        %625 = vmatpush.msra.mxu0 0.0
        %626 = vmatpush.msra.mxu0 0.0
        %627 = vmatpush.msra.mxu0 0.0
        %628 = vmatpush.msra.mxu0 0.0
        %629 = vmatpush.msra.mxu0 0.0
        %630 = vmatpush.msra.mxu0 0.0
        %631 = vmatpush.msra.mxu0 0.0
        %632 = vmatpush.msra.mxu0 0.0
        %633 = vmatpush.msra.mxu0 0.0
        %634 = vmatpush.msra.mxu0 0.0
        %635 = vmatpush.msra.mxu0 0.0
        %636 = vmatpush.msra.mxu0 0.0
        %637 = vmatpush.msra.mxu0 0.0
        %638 = vmatpush.msra.mxu0 0.0
        %v639 = vand.u32 %v217, 4294901760
        %640 = vmatpush.msra.mxu0 %v639
        %v641 = vand.u32 %v213, 4294901760
        %642 = vmatpush.msra.mxu0 %v641
        %v643 = vand.u32 %v221, 4294901760
        %v644 = vsub.f32 %v221, %v643
        %v645 = vand.u32 %v644, 4294901760
        %646 = vmatmul.f32.gmra.mxu0 %v645
        %v647 = vpop.f32.mrf.mxu0
        %v648 = vadd.f32 %v623, %v647
        %649 = vdwg.mxu0
        %650 = vmatpush.msra.mxu0 0.0
        %651 = vmatpush.msra.mxu0 0.0
        %652 = vmatpush.msra.mxu0 0.0
        %653 = vmatpush.msra.mxu0 0.0
        %654 = vmatpush.msra.mxu0 0.0
        %655 = vmatpush.msra.mxu0 0.0
        %656 = vmatpush.msra.mxu0 0.0
        %657 = vmatpush.msra.mxu0 0.0
        %658 = vmatpush.msra.mxu0 0.0
        %659 = vmatpush.msra.mxu0 0.0
        %660 = vmatpush.msra.mxu0 0.0
        %661 = vmatpush.msra.mxu0 0.0
        %662 = vmatpush.msra.mxu0 0.0
        %663 = vmatpush.msra.mxu0 0.0
        %v664 = vand.u32 %v217, 4294901760
        %v665 = vsub.f32 %v217, %v664
        %v666 = vand.u32 %v665, 4294901760
        %667 = vmatpush.msra.mxu0 %v666
        %v668 = vand.u32 %v213, 4294901760
        %v669 = vsub.f32 %v213, %v668
        %v670 = vand.u32 %v669, 4294901760
        %671 = vmatpush.msra.mxu0 %v670
        %v672 = vand.u32 %v221, 4294901760
        %673 = vmatmul.f32.gmra.mxu0 %v672
        %v674 = vpop.f32.mrf.mxu0
        %v675 = vadd.f32 %v648, %v674
        %676 = vdwg.mxu0
        %677 = vmatpush.msra.mxu0 0.0
        %678 = vmatpush.msra.mxu0 0.0
        %679 = vmatpush.msra.mxu0 0.0
        %680 = vmatpush.msra.mxu0 0.0
        %681 = vmatpush.msra.mxu0 0.0
        %682 = vmatpush.msra.mxu0 0.0
        %683 = vmatpush.msra.mxu0 0.0
        %684 = vmatpush.msra.mxu0 0.0
        %685 = vmatpush.msra.mxu0 0.0
        %686 = vmatpush.msra.mxu0 0.0
        %687 = vmatpush.msra.mxu0 0.0
        %688 = vmatpush.msra.mxu0 0.0
        %689 = vmatpush.msra.mxu0 0.0
        %690 = vmatpush.msra.mxu0 0.0
        %v691 = vand.u32 %v217, 4294901760
        %692 = vmatpush.msra.mxu0 %v691
        %v693 = vand.u32 %v213, 4294901760
        %694 = vmatpush.msra.mxu0 %v693
        %v695 = vand.u32 %v221, 4294901760
        %696 = vmatmul.f32.gmra.mxu0 %v695
        %v697 = vpop.f32.mrf.mxu0
        %v698 = vadd.f32 %v675, %v697
        %699 = vdwg.mxu0
        %700 = vmatpush.msra.mxu0 0.0
        %701 = vmatpush.msra.mxu0 0.0
        %702 = vmatpush.msra.mxu0 0.0
        %703 = vmatpush.msra.mxu0 0.0
        %704 = vmatpush.msra.mxu0 0.0
        %705 = vmatpush.msra.mxu0 0.0
        %706 = vmatpush.msra.mxu0 0.0
        %707 = vmatpush.msra.mxu0 0.0
        %708 = vmatpush.msra.mxu0 0.0
        %709 = vmatpush.msra.mxu0 0.0
        %710 = vmatpush.msra.mxu0 0.0
        %711 = vmatpush.msra.mxu0 0.0
        %712 = vmatpush.msra.mxu0 0.0
        %713 = vmatpush.msra.mxu0 0.0
        %v714 = vand.u32 %v218, 4294901760
        %715 = vmatpush.msra.mxu0 %v714
        %v716 = vand.u32 %v214, 4294901760
        %717 = vmatpush.msra.mxu0 %v716
        %v718 = vand.u32 %v221, 4294901760
        %v719 = vsub.f32 %v221, %v718
        %v720 = vand.u32 %v719, 4294901760
        %v721 = vsub.f32 %v719, %v720
        %v722 = vand.u32 %v721, 4294901760
        %723 = vmatmul.f32.gmra.mxu0 %v722
        %v724 = vpop.f32.mrf.mxu0
        %v725 = vadd.f32 0.0, %v724
        %726 = vdwg.mxu0
        %727 = vmatpush.msra.mxu0 0.0
        %728 = vmatpush.msra.mxu0 0.0
        %729 = vmatpush.msra.mxu0 0.0
        %730 = vmatpush.msra.mxu0 0.0
        %731 = vmatpush.msra.mxu0 0.0
        %732 = vmatpush.msra.mxu0 0.0
        %733 = vmatpush.msra.mxu0 0.0
        %734 = vmatpush.msra.mxu0 0.0
        %735 = vmatpush.msra.mxu0 0.0
        %736 = vmatpush.msra.mxu0 0.0
        %737 = vmatpush.msra.mxu0 0.0
        %738 = vmatpush.msra.mxu0 0.0
        %739 = vmatpush.msra.mxu0 0.0
        %740 = vmatpush.msra.mxu0 0.0
        %v741 = vand.u32 %v218, 4294901760
        %v742 = vsub.f32 %v218, %v741
        %v743 = vand.u32 %v742, 4294901760
        %v744 = vsub.f32 %v742, %v743
        %v745 = vand.u32 %v744, 4294901760
        %746 = vmatpush.msra.mxu0 %v745
        %v747 = vand.u32 %v214, 4294901760
        %v748 = vsub.f32 %v214, %v747
        %v749 = vand.u32 %v748, 4294901760
        %v750 = vsub.f32 %v748, %v749
        %v751 = vand.u32 %v750, 4294901760
        %752 = vmatpush.msra.mxu0 %v751
        %v753 = vand.u32 %v221, 4294901760
        %754 = vmatmul.f32.gmra.mxu0 %v753
        %v755 = vpop.f32.mrf.mxu0
        %v756 = vadd.f32 %v725, %v755
        %757 = vdwg.mxu0
        %758 = vmatpush.msra.mxu0 0.0
        %759 = vmatpush.msra.mxu0 0.0
        %760 = vmatpush.msra.mxu0 0.0
        %761 = vmatpush.msra.mxu0 0.0
        %762 = vmatpush.msra.mxu0 0.0
        %763 = vmatpush.msra.mxu0 0.0
        %764 = vmatpush.msra.mxu0 0.0
        %765 = vmatpush.msra.mxu0 0.0
        %766 = vmatpush.msra.mxu0 0.0
        %767 = vmatpush.msra.mxu0 0.0
        %768 = vmatpush.msra.mxu0 0.0
        %769 = vmatpush.msra.mxu0 0.0
        %770 = vmatpush.msra.mxu0 0.0
        %771 = vmatpush.msra.mxu0 0.0
        %v772 = vand.u32 %v218, 4294901760
        %v773 = vsub.f32 %v218, %v772
        %774 = vmatpush.msra.mxu0 %v773
        %v775 = vand.u32 %v214, 4294901760
        %v776 = vsub.f32 %v214, %v775
        %777 = vmatpush.msra.mxu0 %v776
        %v778 = vand.u32 %v221, 4294901760
        %v779 = vsub.f32 %v221, %v778
        %780 = vmatmul.f32.gmra.mxu0 %v779
        %v781 = vpop.f32.mrf.mxu0
        %v782 = vadd.f32 %v756, %v781
        %783 = vdwg.mxu0
        %784 = vmatpush.msra.mxu0 0.0
        %785 = vmatpush.msra.mxu0 0.0
        %786 = vmatpush.msra.mxu0 0.0
        %787 = vmatpush.msra.mxu0 0.0
        %788 = vmatpush.msra.mxu0 0.0
        %789 = vmatpush.msra.mxu0 0.0
        %790 = vmatpush.msra.mxu0 0.0
        %791 = vmatpush.msra.mxu0 0.0
        %792 = vmatpush.msra.mxu0 0.0
        %793 = vmatpush.msra.mxu0 0.0
        %794 = vmatpush.msra.mxu0 0.0
        %795 = vmatpush.msra.mxu0 0.0
        %796 = vmatpush.msra.mxu0 0.0
        %797 = vmatpush.msra.mxu0 0.0
        %v798 = vand.u32 %v218, 4294901760
        %799 = vmatpush.msra.mxu0 %v798
        %v800 = vand.u32 %v214, 4294901760
        %801 = vmatpush.msra.mxu0 %v800
        %v802 = vand.u32 %v221, 4294901760
        %v803 = vsub.f32 %v221, %v802
        %v804 = vand.u32 %v803, 4294901760
        %805 = vmatmul.f32.gmra.mxu0 %v804
        %v806 = vpop.f32.mrf.mxu0
        %v807 = vadd.f32 %v782, %v806
        %808 = vdwg.mxu0
        %809 = vmatpush.msra.mxu0 0.0
        %810 = vmatpush.msra.mxu0 0.0
        %811 = vmatpush.msra.mxu0 0.0
        %812 = vmatpush.msra.mxu0 0.0
        %813 = vmatpush.msra.mxu0 0.0
        %814 = vmatpush.msra.mxu0 0.0
        %815 = vmatpush.msra.mxu0 0.0
        %816 = vmatpush.msra.mxu0 0.0
        %817 = vmatpush.msra.mxu0 0.0
        %818 = vmatpush.msra.mxu0 0.0
        %819 = vmatpush.msra.mxu0 0.0
        %820 = vmatpush.msra.mxu0 0.0
        %821 = vmatpush.msra.mxu0 0.0
        %822 = vmatpush.msra.mxu0 0.0
        %v823 = vand.u32 %v218, 4294901760
        %v824 = vsub.f32 %v218, %v823
        %v825 = vand.u32 %v824, 4294901760
        %826 = vmatpush.msra.mxu0 %v825
        %v827 = vand.u32 %v214, 4294901760
        %v828 = vsub.f32 %v214, %v827
        %v829 = vand.u32 %v828, 4294901760
        %830 = vmatpush.msra.mxu0 %v829
        %v831 = vand.u32 %v221, 4294901760
        %832 = vmatmul.f32.gmra.mxu0 %v831
        %v833 = vpop.f32.mrf.mxu0
        %v834 = vadd.f32 %v807, %v833
        %835 = vdwg.mxu0
        %836 = vmatpush.msra.mxu0 0.0
        %837 = vmatpush.msra.mxu0 0.0
        %838 = vmatpush.msra.mxu0 0.0
        %839 = vmatpush.msra.mxu0 0.0
        %840 = vmatpush.msra.mxu0 0.0
        %841 = vmatpush.msra.mxu0 0.0
        %842 = vmatpush.msra.mxu0 0.0
        %843 = vmatpush.msra.mxu0 0.0
        %844 = vmatpush.msra.mxu0 0.0
        %845 = vmatpush.msra.mxu0 0.0
        %846 = vmatpush.msra.mxu0 0.0
        %847 = vmatpush.msra.mxu0 0.0
        %848 = vmatpush.msra.mxu0 0.0
        %849 = vmatpush.msra.mxu0 0.0
        %v850 = vand.u32 %v218, 4294901760
        %851 = vmatpush.msra.mxu0 %v850
        %v852 = vand.u32 %v214, 4294901760
        %853 = vmatpush.msra.mxu0 %v852
        %v854 = vand.u32 %v221, 4294901760
        %855 = vmatmul.f32.gmra.mxu0 %v854
        %v856 = vpop.f32.mrf.mxu0
        %v857 = vadd.f32 %v834, %v856
        %858 = vdwg.mxu0
        %v859 = vld [vmem:[%s2] sm:$0xf]
        %v861 = vperm.slane %v859, 0
        %v862 = vperm.slane %v859, 1
        %v863 = vperm.slane %v859, 2
        %v864 = vperm.slane %v859, 3
        %v869 = vmul.f32 %v380, %v861
        %v870 = vmul.f32 %v539, %v862
        %v871 = vmul.f32 %v698, %v863
        %v872 = vmul.f32 %v857, %v864
        %v873 = vld [vmem:[%s3] sm:$0xf]
        %v875 = vperm.slane %v873, 0
        %v876 = vperm.slane %v873, 1
        %v877 = vperm.slane %v873, 2
        %v878 = vperm.slane %v873, 3
        %v883 = vadd.f32 %v869, %v875
        %v884 = vadd.f32 %v870, %v876
        %v885 = vadd.f32 %v871, %v877
        %v886 = vadd.f32 %v872, %v878
        %v887 = vand.u32 2147483647, %v883
        %vm888 = vcmp.le.f32.partialorder %v887, 0.7853982
        %vm889 = vcmp.lt.s32.totalorder %v883, 0
        %v890 = vand.u32 %v883, 2139095040
        %v891 = vshrl.u32 %v890, 23
        %v892 = vsub.s32 %v891, 127
        %v893 = vand.u32 2147483647, %v883
        %v894 = vand.u32 %v893, 8388607
        %v895 = vor.u32 %v894, 8388608
        %v896 = vsub.s32 0, %v895
        %v897 = vadd.s32 %v892, 1
        %vm898 = vcmp.gt.s32.totalorder %v897, 0
        %v899 = vsel %vm898, %v897, 0
        %v900 = vshrl.u32 %v899, 5
        %v901 = vand.u32 %v899, 31
        %v902 = vsub.s32 32, %v901
        %v903 = vshrl.u32 683565275, %v902
        %v904 = vshll.u32 683565275, %v901
        %v905 = vshrl.u32 2475754826, %v902
        %v906 = vor.u32 %v904, %v905
        %v907 = vshll.u32 2475754826, %v901
        %v908 = vshrl.u32 2131351028, %v902
        %v909 = vor.u32 %v907, %v908
        %v910 = vshll.u32 2131351028, %v901
        %v911 = vshrl.u32 2102212464, %v902
        %v912 = vor.u32 %v910, %v911
        %v913 = vshll.u32 2102212464, %v901
        %v914 = vshrl.u32 920167782, %v902
        %v915 = vor.u32 %v913, %v914
        %v916 = vshll.u32 920167782, %v901
        %v917 = vshrl.u32 1326507024, %v902
        %v918 = vor.u32 %v916, %v917
        %vm919 = vcmp.lt.s32.totalorder %v900, 1
        %vm920 = vcmp.lt.s32.totalorder %v900, 2
        %vm921 = vcmp.lt.s32.totalorder %v900, 3
        %vm922 = vcmp.lt.s32.totalorder %v900, 4
        %v923 = vsel %vm919, %v903, %v906
        %v924 = vsel %vm922, %v912, 2102212464
        %v925 = vsel %vm921, %v909, %v924
        %v926 = vsel %vm920, %v923, %v925
        %v927 = vsel %vm919, %v906, %v909
        %v928 = vsel %vm922, %v915, 920167782
        %v929 = vsel %vm921, %v912, %v928
        %v930 = vsel %vm920, %v927, %v929
        %v931 = vsel %vm919, %v909, %v912
        %v932 = vsel %vm922, %v918, 1326507024
        %v933 = vsel %vm921, %v915, %v932
        %v934 = vsel %vm920, %v931, %v933
        %v935 = vshll.u32 %v895, 8
        %v936 = vand.u32 %v935, 65535
        %v937 = vshrl.u32 %v935, 16
        %v938 = vand.u32 %v934, 65535
        %v939 = vshrl.u32 %v934, 16
        %v940 = vmul.u32 %v936, %v938
        %v941 = vmul.u32 %v936, %v939
        %v942 = vmul.u32 %v937, %v938
        %v943 = vmul.u32 %v937, %v939
        %v944 = vshll.u32 %v941, 16
        %v945 = vshrl.u32 %v941, 16
        %v946 = vshll.u32 %v942, 16
        %v947 = vshrl.u32 %v942, 16
        %vm948 = vc.u32 %v940, %v944
        %v949 = vsel %vm948, 1, 0
        %v950 = vadd.s32 %v940, %v944
        %v951 = vadd.s32 %v943, %v949
        %vm952 = vc.u32 %v950, %v946
        %v953 = vsel %vm952, 1, 0
        %v954 = vadd.s32 %v950, %v946
        %v955 = vadd.s32 %v951, %v953
        %v956 = vadd.s32 %v955, %v945
        %v957 = vadd.s32 %v956, %v947
        %v958 = vand.u32 %v935, 65535
        %v959 = vshrl.u32 %v935, 16
        %v960 = vand.u32 %v930, 65535
        %v961 = vshrl.u32 %v930, 16
        %v962 = vmul.u32 %v958, %v960
        %v963 = vmul.u32 %v958, %v961
        %v964 = vmul.u32 %v959, %v960
        %v965 = vmul.u32 %v959, %v961
        %v966 = vshll.u32 %v963, 16
        %v967 = vshrl.u32 %v963, 16
        %v968 = vshll.u32 %v964, 16
        %v969 = vshrl.u32 %v964, 16
        %vm970 = vc.u32 %v962, %v966
        %v971 = vsel %vm970, 1, 0
        %v972 = vadd.s32 %v962, %v966
        %v973 = vadd.s32 %v965, %v971
        %vm974 = vc.u32 %v972, %v968
        %v975 = vsel %vm974, 1, 0
        %v976 = vadd.s32 %v972, %v968
        %v977 = vadd.s32 %v973, %v975
        %v978 = vadd.s32 %v977, %v967
        %v979 = vadd.s32 %v978, %v969
        %v980 = vmul.u32 %v935, %v926
        %v981 = vadd.s32 %v957, %v976
        %vm982 = vc.u32 %v957, %v976
        %v983 = vadd.s32 %v979, 1
        %v984 = vsel %vm982, %v983, %v979
        %v985 = vadd.s32 %v980, %v984
        %v986 = vadd.s32 %v985, 536870912
        %v987 = vshrl.u32 %v986, 30
        %v988 = vshll.u32 %v987, 30
        %v989 = vsub.s32 %v985, %v988
        %vm990 = vcmp.lt.s32.totalorder %v989, 0
        %v991 = vsub.s32 0, %v989
        %v992 = vsel %vm990, %v991, %v989
        %v993 = vclz %v992
        %v994 = vsub.s32 %v993, 2
        %vm995 = vcmp.gt.s32.totalorder 0, %v994
        %v996 = vsel %vm995, 0, %v994
        %v997 = vsub.s32 32, %v996
        %v998 = vshll.u32 %v989, %v996
        %v999 = vshrl.u32 %v981, %v997
        %v1000 = vor.u32 %v998, %v999
        %v1001 = vsub.s32 4294967266, %v996
        %v1002 = vadd.s32 %v1001, 127
        %v1003 = vshll.u32 %v1002, 23
        %v1004 = vor.u32 4788187, %v1003
        %v1005 = vand.u32 2147483647, %v1004
        %v1007 = vcvt.s32.f32 %v1000
        %v1008 = vmul.f32 %v1007, %v1005
        %v1009 = vxor.u32 %v1008, 2147483648
        %v1010 = vsel %vm889, %v1009, %v1008
        %v1011 = vsub.s32 4, %v987
        %v1012 = vsel %vm889, %v1011, %v987
        %v1013 = vsel %vm888, %v883, %v1010
        %v1014 = vsel %vm888, 0, %v1012
        %v1015 = vmul.f32 %v1013, %v1013
        %v1016 = vmul.f32 %v1015, -0.001358992
        %v1017 = vadd.f32 %v1016, 0.041655596
        %v1018 = vmul.f32 %v1015, %v1017
        %v1019 = vadd.f32 %v1018, -0.4999988
        %v1020 = vmul.f32 %v1015, %v1019
        %v1021 = vadd.f32 1.0, %v1020
        %v1022 = vmul.f32 %v1013, %v1013
        %v1023 = vmul.f32 %v1022, -0.00019511016
        %v1024 = vadd.f32 %v1023, 0.008332121
        %v1025 = vmul.f32 %v1022, %v1024
        %v1026 = vadd.f32 %v1025, -0.16666654
        %v1027 = vmul.f32 %v1022, %v1026
        %v1028 = vadd.f32 %v1027, 1.0
        %v1029 = vmul.f32 %v1028, %v1013
        %vm1030 = vweird.f32 %v883
        %v1031 = vadd.s32 %v1014, 3
        %v1032 = vand.u32 %v1031, 3
        %vm1033 = vcmp.lt.s32.totalorder %v1032, 2
        %vm1034 = vcmp.eq.s32.totalorder %v1032, 0
        %v1035 = vxor.u32 %v1029, 2147483648
        %v1036 = vsel %vm1034, %v1021, %v1035
        %vm1037 = vcmp.eq.s32.totalorder %v1032, 2
        %v1038 = vxor.u32 %v1021, 2147483648
        %v1039 = vsel %vm1037, %v1038, %v1029
        %v1040 = vsel %vm1033, %v1036, %v1039
        %v1041 = vsel %vm1030, nan, %v1040
        %v1042 = vand.u32 2147483647, %v884
        %vm1043 = vcmp.le.f32.partialorder %v1042, 0.7853982
        %vm1044 = vcmp.lt.s32.totalorder %v884, 0
        %v1045 = vand.u32 %v884, 2139095040
        %v1046 = vshrl.u32 %v1045, 23
        %v1047 = vsub.s32 %v1046, 127
        %v1048 = vand.u32 2147483647, %v884
        %v1049 = vand.u32 %v1048, 8388607
        %v1050 = vor.u32 %v1049, 8388608
        %v1051 = vsub.s32 0, %v1050
        %v1052 = vadd.s32 %v1047, 1
        %vm1053 = vcmp.gt.s32.totalorder %v1052, 0
        %v1054 = vsel %vm1053, %v1052, 0
        %v1055 = vshrl.u32 %v1054, 5
        %v1056 = vand.u32 %v1054, 31
        %v1057 = vsub.s32 32, %v1056
        %v1058 = vshrl.u32 683565275, %v1057
        %v1059 = vshll.u32 683565275, %v1056
        %v1060 = vshrl.u32 2475754826, %v1057
        %v1061 = vor.u32 %v1059, %v1060
        %v1062 = vshll.u32 2475754826, %v1056
        %v1063 = vshrl.u32 2131351028, %v1057
        %v1064 = vor.u32 %v1062, %v1063
        %v1065 = vshll.u32 2131351028, %v1056
        %v1066 = vshrl.u32 2102212464, %v1057
        %v1067 = vor.u32 %v1065, %v1066
        %v1068 = vshll.u32 2102212464, %v1056
        %v1069 = vshrl.u32 920167782, %v1057
        %v1070 = vor.u32 %v1068, %v1069
        %v1071 = vshll.u32 920167782, %v1056
        %v1072 = vshrl.u32 1326507024, %v1057
        %v1073 = vor.u32 %v1071, %v1072
        %vm1074 = vcmp.lt.s32.totalorder %v1055, 1
        %vm1075 = vcmp.lt.s32.totalorder %v1055, 2
        %vm1076 = vcmp.lt.s32.totalorder %v1055, 3
        %vm1077 = vcmp.lt.s32.totalorder %v1055, 4
        %v1078 = vsel %vm1074, %v1058, %v1061
        %v1079 = vsel %vm1077, %v1067, 2102212464
        %v1080 = vsel %vm1076, %v1064, %v1079
        %v1081 = vsel %vm1075, %v1078, %v1080
        %v1082 = vsel %vm1074, %v1061, %v1064
        %v1083 = vsel %vm1077, %v1070, 920167782
        %v1084 = vsel %vm1076, %v1067, %v1083
        %v1085 = vsel %vm1075, %v1082, %v1084
        %v1086 = vsel %vm1074, %v1064, %v1067
        %v1087 = vsel %vm1077, %v1073, 1326507024
        %v1088 = vsel %vm1076, %v1070, %v1087
        %v1089 = vsel %vm1075, %v1086, %v1088
        %v1090 = vshll.u32 %v1050, 8
        %v1091 = vand.u32 %v1090, 65535
        %v1092 = vshrl.u32 %v1090, 16
        %v1093 = vand.u32 %v1089, 65535
        %v1094 = vshrl.u32 %v1089, 16
        %v1095 = vmul.u32 %v1091, %v1093
        %v1096 = vmul.u32 %v1091, %v1094
        %v1097 = vmul.u32 %v1092, %v1093
        %v1098 = vmul.u32 %v1092, %v1094
        %v1099 = vshll.u32 %v1096, 16
        %v1100 = vshrl.u32 %v1096, 16
        %v1101 = vshll.u32 %v1097, 16
        %v1102 = vshrl.u32 %v1097, 16
        %vm1103 = vc.u32 %v1095, %v1099
        %v1104 = vsel %vm1103, 1, 0
        %v1105 = vadd.s32 %v1095, %v1099
        %v1106 = vadd.s32 %v1098, %v1104
        %vm1107 = vc.u32 %v1105, %v1101
        %v1108 = vsel %vm1107, 1, 0
        %v1109 = vadd.s32 %v1105, %v1101
        %v1110 = vadd.s32 %v1106, %v1108
        %v1111 = vadd.s32 %v1110, %v1100
        %v1112 = vadd.s32 %v1111, %v1102
        %v1113 = vand.u32 %v1090, 65535
        %v1114 = vshrl.u32 %v1090, 16
        %v1115 = vand.u32 %v1085, 65535
        %v1116 = vshrl.u32 %v1085, 16
        %v1117 = vmul.u32 %v1113, %v1115
        %v1118 = vmul.u32 %v1113, %v1116
        %v1119 = vmul.u32 %v1114, %v1115
        %v1120 = vmul.u32 %v1114, %v1116
        %v1121 = vshll.u32 %v1118, 16
        %v1122 = vshrl.u32 %v1118, 16
        %v1123 = vshll.u32 %v1119, 16
        %v1124 = vshrl.u32 %v1119, 16
        %vm1125 = vc.u32 %v1117, %v1121
        %v1126 = vsel %vm1125, 1, 0
        %v1127 = vadd.s32 %v1117, %v1121
        %v1128 = vadd.s32 %v1120, %v1126
        %vm1129 = vc.u32 %v1127, %v1123
        %v1130 = vsel %vm1129, 1, 0
        %v1131 = vadd.s32 %v1127, %v1123
        %v1132 = vadd.s32 %v1128, %v1130
        %v1133 = vadd.s32 %v1132, %v1122
        %v1134 = vadd.s32 %v1133, %v1124
        %v1135 = vmul.u32 %v1090, %v1081
        %v1136 = vadd.s32 %v1112, %v1131
        %vm1137 = vc.u32 %v1112, %v1131
        %v1138 = vadd.s32 %v1134, 1
        %v1139 = vsel %vm1137, %v1138, %v1134
        %v1140 = vadd.s32 %v1135, %v1139
        %v1141 = vadd.s32 %v1140, 536870912
        %v1142 = vshrl.u32 %v1141, 30
        %v1143 = vshll.u32 %v1142, 30
        %v1144 = vsub.s32 %v1140, %v1143
        %vm1145 = vcmp.lt.s32.totalorder %v1144, 0
        %v1146 = vsub.s32 0, %v1144
        %v1147 = vsel %vm1145, %v1146, %v1144
        %v1148 = vclz %v1147
        %v1149 = vsub.s32 %v1148, 2
        %vm1150 = vcmp.gt.s32.totalorder 0, %v1149
        %v1151 = vsel %vm1150, 0, %v1149
        %v1152 = vsub.s32 32, %v1151
        %v1153 = vshll.u32 %v1144, %v1151
        %v1154 = vshrl.u32 %v1136, %v1152
        %v1155 = vor.u32 %v1153, %v1154
        %v1156 = vsub.s32 4294967266, %v1151
        %v1157 = vadd.s32 %v1156, 127
        %v1158 = vshll.u32 %v1157, 23
        %v1159 = vor.u32 4788187, %v1158
        %v1160 = vand.u32 2147483647, %v1159
        %v1162 = vcvt.s32.f32 %v1155
        %v1163 = vmul.f32 %v1162, %v1160
        %v1164 = vxor.u32 %v1163, 2147483648
        %v1165 = vsel %vm1044, %v1164, %v1163
        %v1166 = vsub.s32 4, %v1142
        %v1167 = vsel %vm1044, %v1166, %v1142
        %v1168 = vsel %vm1043, %v884, %v1165
        %v1169 = vsel %vm1043, 0, %v1167
        %v1170 = vmul.f32 %v1168, %v1168
        %v1171 = vmul.f32 %v1170, -0.001358992
        %v1172 = vadd.f32 %v1171, 0.041655596
        %v1173 = vmul.f32 %v1170, %v1172
        %v1174 = vadd.f32 %v1173, -0.4999988
        %v1175 = vmul.f32 %v1170, %v1174
        %v1176 = vadd.f32 1.0, %v1175
        %v1177 = vmul.f32 %v1168, %v1168
        %v1178 = vmul.f32 %v1177, -0.00019511016
        %v1179 = vadd.f32 %v1178, 0.008332121
        %v1180 = vmul.f32 %v1177, %v1179
        %v1181 = vadd.f32 %v1180, -0.16666654
        %v1182 = vmul.f32 %v1177, %v1181
        %v1183 = vadd.f32 %v1182, 1.0
        %v1184 = vmul.f32 %v1183, %v1168
        %vm1185 = vweird.f32 %v884
        %v1186 = vadd.s32 %v1169, 3
        %v1187 = vand.u32 %v1186, 3
        %vm1188 = vcmp.lt.s32.totalorder %v1187, 2
        %vm1189 = vcmp.eq.s32.totalorder %v1187, 0
        %v1190 = vxor.u32 %v1184, 2147483648
        %v1191 = vsel %vm1189, %v1176, %v1190
        %vm1192 = vcmp.eq.s32.totalorder %v1187, 2
        %v1193 = vxor.u32 %v1176, 2147483648
        %v1194 = vsel %vm1192, %v1193, %v1184
        %v1195 = vsel %vm1188, %v1191, %v1194
        %v1196 = vsel %vm1185, nan, %v1195
        %v1197 = vand.u32 2147483647, %v885
        %vm1198 = vcmp.le.f32.partialorder %v1197, 0.7853982
        %vm1199 = vcmp.lt.s32.totalorder %v885, 0
        %v1200 = vand.u32 %v885, 2139095040
        %v1201 = vshrl.u32 %v1200, 23
        %v1202 = vsub.s32 %v1201, 127
        %v1203 = vand.u32 2147483647, %v885
        %v1204 = vand.u32 %v1203, 8388607
        %v1205 = vor.u32 %v1204, 8388608
        %v1206 = vsub.s32 0, %v1205
        %v1207 = vadd.s32 %v1202, 1
        %vm1208 = vcmp.gt.s32.totalorder %v1207, 0
        %v1209 = vsel %vm1208, %v1207, 0
        %v1210 = vshrl.u32 %v1209, 5
        %v1211 = vand.u32 %v1209, 31
        %v1212 = vsub.s32 32, %v1211
        %v1213 = vshrl.u32 683565275, %v1212
        %v1214 = vshll.u32 683565275, %v1211
        %v1215 = vshrl.u32 2475754826, %v1212
        %v1216 = vor.u32 %v1214, %v1215
        %v1217 = vshll.u32 2475754826, %v1211
        %v1218 = vshrl.u32 2131351028, %v1212
        %v1219 = vor.u32 %v1217, %v1218
        %v1220 = vshll.u32 2131351028, %v1211
        %v1221 = vshrl.u32 2102212464, %v1212
        %v1222 = vor.u32 %v1220, %v1221
        %v1223 = vshll.u32 2102212464, %v1211
        %v1224 = vshrl.u32 920167782, %v1212
        %v1225 = vor.u32 %v1223, %v1224
        %v1226 = vshll.u32 920167782, %v1211
        %v1227 = vshrl.u32 1326507024, %v1212
        %v1228 = vor.u32 %v1226, %v1227
        %vm1229 = vcmp.lt.s32.totalorder %v1210, 1
        %vm1230 = vcmp.lt.s32.totalorder %v1210, 2
        %vm1231 = vcmp.lt.s32.totalorder %v1210, 3
        %vm1232 = vcmp.lt.s32.totalorder %v1210, 4
        %v1233 = vsel %vm1229, %v1213, %v1216
        %v1234 = vsel %vm1232, %v1222, 2102212464
        %v1235 = vsel %vm1231, %v1219, %v1234
        %v1236 = vsel %vm1230, %v1233, %v1235
        %v1237 = vsel %vm1229, %v1216, %v1219
        %v1238 = vsel %vm1232, %v1225, 920167782
        %v1239 = vsel %vm1231, %v1222, %v1238
        %v1240 = vsel %vm1230, %v1237, %v1239
        %v1241 = vsel %vm1229, %v1219, %v1222
        %v1242 = vsel %vm1232, %v1228, 1326507024
        %v1243 = vsel %vm1231, %v1225, %v1242
        %v1244 = vsel %vm1230, %v1241, %v1243
        %v1245 = vshll.u32 %v1205, 8
        %v1246 = vand.u32 %v1245, 65535
        %v1247 = vshrl.u32 %v1245, 16
        %v1248 = vand.u32 %v1244, 65535
        %v1249 = vshrl.u32 %v1244, 16
        %v1250 = vmul.u32 %v1246, %v1248
        %v1251 = vmul.u32 %v1246, %v1249
        %v1252 = vmul.u32 %v1247, %v1248
        %v1253 = vmul.u32 %v1247, %v1249
        %v1254 = vshll.u32 %v1251, 16
        %v1255 = vshrl.u32 %v1251, 16
        %v1256 = vshll.u32 %v1252, 16
        %v1257 = vshrl.u32 %v1252, 16
        %vm1258 = vc.u32 %v1250, %v1254
        %v1259 = vsel %vm1258, 1, 0
        %v1260 = vadd.s32 %v1250, %v1254
        %v1261 = vadd.s32 %v1253, %v1259
        %vm1262 = vc.u32 %v1260, %v1256
        %v1263 = vsel %vm1262, 1, 0
        %v1264 = vadd.s32 %v1260, %v1256
        %v1265 = vadd.s32 %v1261, %v1263
        %v1266 = vadd.s32 %v1265, %v1255
        %v1267 = vadd.s32 %v1266, %v1257
        %v1268 = vand.u32 %v1245, 65535
        %v1269 = vshrl.u32 %v1245, 16
        %v1270 = vand.u32 %v1240, 65535
        %v1271 = vshrl.u32 %v1240, 16
        %v1272 = vmul.u32 %v1268, %v1270
        %v1273 = vmul.u32 %v1268, %v1271
        %v1274 = vmul.u32 %v1269, %v1270
        %v1275 = vmul.u32 %v1269, %v1271
        %v1276 = vshll.u32 %v1273, 16
        %v1277 = vshrl.u32 %v1273, 16
        %v1278 = vshll.u32 %v1274, 16
        %v1279 = vshrl.u32 %v1274, 16
        %vm1280 = vc.u32 %v1272, %v1276
        %v1281 = vsel %vm1280, 1, 0
        %v1282 = vadd.s32 %v1272, %v1276
        %v1283 = vadd.s32 %v1275, %v1281
        %vm1284 = vc.u32 %v1282, %v1278
        %v1285 = vsel %vm1284, 1, 0
        %v1286 = vadd.s32 %v1282, %v1278
        %v1287 = vadd.s32 %v1283, %v1285
        %v1288 = vadd.s32 %v1287, %v1277
        %v1289 = vadd.s32 %v1288, %v1279
        %v1290 = vmul.u32 %v1245, %v1236
        %v1291 = vadd.s32 %v1267, %v1286
        %vm1292 = vc.u32 %v1267, %v1286
        %v1293 = vadd.s32 %v1289, 1
        %v1294 = vsel %vm1292, %v1293, %v1289
        %v1295 = vadd.s32 %v1290, %v1294
        %v1296 = vadd.s32 %v1295, 536870912
        %v1297 = vshrl.u32 %v1296, 30
        %v1298 = vshll.u32 %v1297, 30
        %v1299 = vsub.s32 %v1295, %v1298
        %vm1300 = vcmp.lt.s32.totalorder %v1299, 0
        %v1301 = vsub.s32 0, %v1299
        %v1302 = vsel %vm1300, %v1301, %v1299
        %v1303 = vclz %v1302
        %v1304 = vsub.s32 %v1303, 2
        %vm1305 = vcmp.gt.s32.totalorder 0, %v1304
        %v1306 = vsel %vm1305, 0, %v1304
        %v1307 = vsub.s32 32, %v1306
        %v1308 = vshll.u32 %v1299, %v1306
        %v1309 = vshrl.u32 %v1291, %v1307
        %v1310 = vor.u32 %v1308, %v1309
        %v1311 = vsub.s32 4294967266, %v1306
        %v1312 = vadd.s32 %v1311, 127
        %v1313 = vshll.u32 %v1312, 23
        %v1314 = vor.u32 4788187, %v1313
        %v1315 = vand.u32 2147483647, %v1314
        %v1317 = vcvt.s32.f32 %v1310
        %v1318 = vmul.f32 %v1317, %v1315
        %v1319 = vxor.u32 %v1318, 2147483648
        %v1320 = vsel %vm1199, %v1319, %v1318
        %v1321 = vsub.s32 4, %v1297
        %v1322 = vsel %vm1199, %v1321, %v1297
        %v1323 = vsel %vm1198, %v885, %v1320
        %v1324 = vsel %vm1198, 0, %v1322
        %v1325 = vmul.f32 %v1323, %v1323
        %v1326 = vmul.f32 %v1325, -0.001358992
        %v1327 = vadd.f32 %v1326, 0.041655596
        %v1328 = vmul.f32 %v1325, %v1327
        %v1329 = vadd.f32 %v1328, -0.4999988
        %v1330 = vmul.f32 %v1325, %v1329
        %v1331 = vadd.f32 1.0, %v1330
        %v1332 = vmul.f32 %v1323, %v1323
        %v1333 = vmul.f32 %v1332, -0.00019511016
        %v1334 = vadd.f32 %v1333, 0.008332121
        %v1335 = vmul.f32 %v1332, %v1334
        %v1336 = vadd.f32 %v1335, -0.16666654
        %v1337 = vmul.f32 %v1332, %v1336
        %v1338 = vadd.f32 %v1337, 1.0
        %v1339 = vmul.f32 %v1338, %v1323
        %vm1340 = vweird.f32 %v885
        %v1341 = vadd.s32 %v1324, 3
        %v1342 = vand.u32 %v1341, 3
        %vm1343 = vcmp.lt.s32.totalorder %v1342, 2
        %vm1344 = vcmp.eq.s32.totalorder %v1342, 0
        %v1345 = vxor.u32 %v1339, 2147483648
        %v1346 = vsel %vm1344, %v1331, %v1345
        %vm1347 = vcmp.eq.s32.totalorder %v1342, 2
        %v1348 = vxor.u32 %v1331, 2147483648
        %v1349 = vsel %vm1347, %v1348, %v1339
        %v1350 = vsel %vm1343, %v1346, %v1349
        %v1351 = vsel %vm1340, nan, %v1350
        %v1352 = vand.u32 2147483647, %v886
        %vm1353 = vcmp.le.f32.partialorder %v1352, 0.7853982
        %vm1354 = vcmp.lt.s32.totalorder %v886, 0
        %v1355 = vand.u32 %v886, 2139095040
        %v1356 = vshrl.u32 %v1355, 23
        %v1357 = vsub.s32 %v1356, 127
        %v1358 = vand.u32 2147483647, %v886
        %v1359 = vand.u32 %v1358, 8388607
        %v1360 = vor.u32 %v1359, 8388608
        %v1361 = vsub.s32 0, %v1360
        %v1362 = vadd.s32 %v1357, 1
        %vm1363 = vcmp.gt.s32.totalorder %v1362, 0
        %v1364 = vsel %vm1363, %v1362, 0
        %v1365 = vshrl.u32 %v1364, 5
        %v1366 = vand.u32 %v1364, 31
        %v1367 = vsub.s32 32, %v1366
        %v1368 = vshrl.u32 683565275, %v1367
        %v1369 = vshll.u32 683565275, %v1366
        %v1370 = vshrl.u32 2475754826, %v1367
        %v1371 = vor.u32 %v1369, %v1370
        %v1372 = vshll.u32 2475754826, %v1366
        %v1373 = vshrl.u32 2131351028, %v1367
        %v1374 = vor.u32 %v1372, %v1373
        %v1375 = vshll.u32 2131351028, %v1366
        %v1376 = vshrl.u32 2102212464, %v1367
        %v1377 = vor.u32 %v1375, %v1376
        %v1378 = vshll.u32 2102212464, %v1366
        %v1379 = vshrl.u32 920167782, %v1367
        %v1380 = vor.u32 %v1378, %v1379
        %v1381 = vshll.u32 920167782, %v1366
        %v1382 = vshrl.u32 1326507024, %v1367
        %v1383 = vor.u32 %v1381, %v1382
        %vm1384 = vcmp.lt.s32.totalorder %v1365, 1
        %vm1385 = vcmp.lt.s32.totalorder %v1365, 2
        %vm1386 = vcmp.lt.s32.totalorder %v1365, 3
        %vm1387 = vcmp.lt.s32.totalorder %v1365, 4
        %v1388 = vsel %vm1384, %v1368, %v1371
        %v1389 = vsel %vm1387, %v1377, 2102212464
        %v1390 = vsel %vm1386, %v1374, %v1389
        %v1391 = vsel %vm1385, %v1388, %v1390
        %v1392 = vsel %vm1384, %v1371, %v1374
        %v1393 = vsel %vm1387, %v1380, 920167782
        %v1394 = vsel %vm1386, %v1377, %v1393
        %v1395 = vsel %vm1385, %v1392, %v1394
        %v1396 = vsel %vm1384, %v1374, %v1377
        %v1397 = vsel %vm1387, %v1383, 1326507024
        %v1398 = vsel %vm1386, %v1380, %v1397
        %v1399 = vsel %vm1385, %v1396, %v1398
        %v1400 = vshll.u32 %v1360, 8
        %v1401 = vand.u32 %v1400, 65535
        %v1402 = vshrl.u32 %v1400, 16
        %v1403 = vand.u32 %v1399, 65535
        %v1404 = vshrl.u32 %v1399, 16
        %v1405 = vmul.u32 %v1401, %v1403
        %v1406 = vmul.u32 %v1401, %v1404
        %v1407 = vmul.u32 %v1402, %v1403
        %v1408 = vmul.u32 %v1402, %v1404
        %v1409 = vshll.u32 %v1406, 16
        %v1410 = vshrl.u32 %v1406, 16
        %v1411 = vshll.u32 %v1407, 16
        %v1412 = vshrl.u32 %v1407, 16
        %vm1413 = vc.u32 %v1405, %v1409
        %v1414 = vsel %vm1413, 1, 0
        %v1415 = vadd.s32 %v1405, %v1409
        %v1416 = vadd.s32 %v1408, %v1414
        %vm1417 = vc.u32 %v1415, %v1411
        %v1418 = vsel %vm1417, 1, 0
        %v1419 = vadd.s32 %v1415, %v1411
        %v1420 = vadd.s32 %v1416, %v1418
        %v1421 = vadd.s32 %v1420, %v1410
        %v1422 = vadd.s32 %v1421, %v1412
        %v1423 = vand.u32 %v1400, 65535
        %v1424 = vshrl.u32 %v1400, 16
        %v1425 = vand.u32 %v1395, 65535
        %v1426 = vshrl.u32 %v1395, 16
        %v1427 = vmul.u32 %v1423, %v1425
        %v1428 = vmul.u32 %v1423, %v1426
        %v1429 = vmul.u32 %v1424, %v1425
        %v1430 = vmul.u32 %v1424, %v1426
        %v1431 = vshll.u32 %v1428, 16
        %v1432 = vshrl.u32 %v1428, 16
        %v1433 = vshll.u32 %v1429, 16
        %v1434 = vshrl.u32 %v1429, 16
        %vm1435 = vc.u32 %v1427, %v1431
        %v1436 = vsel %vm1435, 1, 0
        %v1437 = vadd.s32 %v1427, %v1431
        %v1438 = vadd.s32 %v1430, %v1436
        %vm1439 = vc.u32 %v1437, %v1433
        %v1440 = vsel %vm1439, 1, 0
        %v1441 = vadd.s32 %v1437, %v1433
        %v1442 = vadd.s32 %v1438, %v1440
        %v1443 = vadd.s32 %v1442, %v1432
        %v1444 = vadd.s32 %v1443, %v1434
        %v1445 = vmul.u32 %v1400, %v1391
        %v1446 = vadd.s32 %v1422, %v1441
        %vm1447 = vc.u32 %v1422, %v1441
        %v1448 = vadd.s32 %v1444, 1
        %v1449 = vsel %vm1447, %v1448, %v1444
        %v1450 = vadd.s32 %v1445, %v1449
        %v1451 = vadd.s32 %v1450, 536870912
        %v1452 = vshrl.u32 %v1451, 30
        %v1453 = vshll.u32 %v1452, 30
        %v1454 = vsub.s32 %v1450, %v1453
        %vm1455 = vcmp.lt.s32.totalorder %v1454, 0
        %v1456 = vsub.s32 0, %v1454
        %v1457 = vsel %vm1455, %v1456, %v1454
        %v1458 = vclz %v1457
        %v1459 = vsub.s32 %v1458, 2
        %vm1460 = vcmp.gt.s32.totalorder 0, %v1459
        %v1461 = vsel %vm1460, 0, %v1459
        %v1462 = vsub.s32 32, %v1461
        %v1463 = vshll.u32 %v1454, %v1461
        %v1464 = vshrl.u32 %v1446, %v1462
        %v1465 = vor.u32 %v1463, %v1464
        %v1466 = vsub.s32 4294967266, %v1461
        %v1467 = vadd.s32 %v1466, 127
        %v1468 = vshll.u32 %v1467, 23
        %v1469 = vor.u32 4788187, %v1468
        %v1470 = vand.u32 2147483647, %v1469
        %v1472 = vcvt.s32.f32 %v1465
        %v1473 = vmul.f32 %v1472, %v1470
        %v1474 = vxor.u32 %v1473, 2147483648
        %v1475 = vsel %vm1354, %v1474, %v1473
        %v1476 = vsub.s32 4, %v1452
        %v1477 = vsel %vm1354, %v1476, %v1452
        %v1478 = vsel %vm1353, %v886, %v1475
        %v1479 = vsel %vm1353, 0, %v1477
        %v1480 = vmul.f32 %v1478, %v1478
        %v1481 = vmul.f32 %v1480, -0.001358992
        %v1482 = vadd.f32 %v1481, 0.041655596
        %v1483 = vmul.f32 %v1480, %v1482
        %v1484 = vadd.f32 %v1483, -0.4999988
        %v1485 = vmul.f32 %v1480, %v1484
        %v1486 = vadd.f32 1.0, %v1485
        %v1487 = vmul.f32 %v1478, %v1478
        %v1488 = vmul.f32 %v1487, -0.00019511016
        %v1489 = vadd.f32 %v1488, 0.008332121
        %v1490 = vmul.f32 %v1487, %v1489
        %v1491 = vadd.f32 %v1490, -0.16666654
        %v1492 = vmul.f32 %v1487, %v1491
        %v1493 = vadd.f32 %v1492, 1.0
        %v1494 = vmul.f32 %v1493, %v1478
        %vm1495 = vweird.f32 %v886
        %v1496 = vadd.s32 %v1479, 3
        %v1497 = vand.u32 %v1496, 3
        %vm1498 = vcmp.lt.s32.totalorder %v1497, 2
        %vm1499 = vcmp.eq.s32.totalorder %v1497, 0
        %v1500 = vxor.u32 %v1494, 2147483648
        %v1501 = vsel %vm1499, %v1486, %v1500
        %vm1502 = vcmp.eq.s32.totalorder %v1497, 2
        %v1503 = vxor.u32 %v1486, 2147483648
        %v1504 = vsel %vm1502, %v1503, %v1494
        %v1505 = vsel %vm1498, %v1501, %v1504
        %v1506 = vsel %vm1495, nan, %v1505
        %1507 = vst [vmem:[%s205] sm:$0xff] %v1041
        %1508 = vst [vmem:[%s205 + $0x8] sm:$0xff] %v1196
        %1509 = vst [vmem:[%s205 + $0x10] sm:$0xff] %v1351
        %1510 = vst [vmem:[%s205 + $0x18] sm:$0xff] %v1506
        %s1511 = sand.u32 %s116, 1
        %s1512 = scalar_lea.sflag [#allocation4], %s1511
        %s1513 = sand.u32 %s116, 1
        %s1514 = smul.addr %s1513, 32
        %s1515 = scalar_lea.vmem [#allocation5], %s1514
        // Predicated region
        $region41: #{tpu_custom_call.1} parent=35 // pred_check
          %p1516 = pneg %p126
        $region42: #{tpu_custom_call.1} parent=35 // pred_check_branch
          %1518 = sbr.rel (%p1516) target = $region44
        $region43: #{tpu_custom_call.1} parent=35 // pred_region
          %1520 = vsyncadd %s1512, 0
          %s1521 = smul.addr %s19, 4
          %s1522 = smul.addr %s1521, 8
          %s1523 = scalar_lea.hbm %s4, %s1522
          %s1525 = sshll.u32 %s1515, 4
          %s1526 = int_to_ptr.vmem [resolvable:$true] %s1525
          %s1527 = sshll.u32 %s1523, 4
          %s1528 = int_to_ptr.hbm [resolvable:$true] %s1527
          %1530 = dma.vmem_to_hbm [thread:$0]  %s1526, 512, %s1528, %s1512
        $region44: #{tpu_custom_call.1} parent=35 // pred_fallthru
          _
      $region36: #{tpu_custom_call.1} parent=5 // pred_fallthru
        _
      %p1531 = scmp.le.s32.totalorder 2, %s14
      // Predicated region
      $region45: #{tpu_custom_call.1} parent=5 // pred_check
        %p1532 = pneg %p1531
      $region46: #{tpu_custom_call.1} parent=5 // pred_check_branch
        %1534 = sbr.rel (%p1532) target = $region48
      $region47: #{tpu_custom_call.1} parent=5 // pred_region
        %s1535 = ssub.s32 %s14, 2
        // Predicated region
        $region49: #{tpu_custom_call.1} parent=47 // pred_check
          %p1536 = pneg %p132
        $region50: #{tpu_custom_call.1} parent=47 // pred_check_branch
          %1538 = sbr.rel (%p1536) target = $region52
        $region51: #{tpu_custom_call.1} parent=47 // pred_region
          %s1539 = sand.u32 %s117, 1
          %s1540 = scalar_lea.sflag [#allocation4], %s1539
          %s1541 = sand.u32 %s117, 1
          %s1542 = smul.addr %s1541, 32
          %s1543 = scalar_lea.vmem [#allocation5], %s1542
          %1545 = dma.done %s1540, 512
        $region52: #{tpu_custom_call.1} parent=47 // pred_fallthru
          _
      $region48: #{tpu_custom_call.1} parent=5 // pred_fallthru
        _
    $region6: #{tpu_custom_call.1} parent=1 // loop_footer
      %s18 = sadd.s32 1, %s14
    $region7: #{tpu_custom_call.1} parent=1 // loop_footer_branch
      %13 = sbr.rel target = $region3
    $region8: #{tpu_custom_call.1} parent=1 // loop_exit
      _
    %1546 = vsyncpa [#allocation3], 1
    %s1547 = scalar_lea.sflag [#allocation3], 1
    %1548 = vsyncpa %s1547, 1
    %1549 = vsyncpa [#allocation4], 1
    %s1550 = scalar_lea.sflag [#allocation4], 1
    %1551 = vsyncpa %s1550, 1

</llo_original>
